<compile_context>
chip_gen: v7x
topology: tpu7x:2x2x1
jax: 0.10.0
libtpu: 0.0.40
codegen_flags: <defaults>
</compile_context>

<pallas_src>
import jax
import jax.numpy as jnp
from jax.experimental import pallas as pl
from jax.experimental.pallas import tpu as pltpu

BN_EPS = 1e-5
LANE = 128


def make_cren_kernel(num_layers, n_rows):
    inv_n = 1.0 / float(n_rows)

    def kernel(x_ref, w_ref, v_ref, out_ref):
        # (1, N) row of 1/N: column (batch-axis) reductions become MXU matmuls
        # instead of XLU sublane reductions.
        ones_row = jnp.full((1, n_rows), inv_n, dtype=jnp.float32)

        def standardize(x):
            # Training-mode BN statistics (biased variance), centered form.
            mean = jnp.dot(ones_row, x, preferred_element_type=jnp.float32)
            xc = x - mean
            var = jnp.dot(ones_row, xc * xc, preferred_element_type=jnp.float32)
            return xc * jax.lax.rsqrt(var + BN_EPS)

        x = x_ref[...].astype(jnp.float32)

        # Input BatchNorm: gamma0 is folded into w_slab[0]; beta0 (a per-column
        # constant) is cancelled by layer-0's BN mean subtraction.
        x = standardize(x)

        for i in range(num_layers):
            w = w_ref[i]            # (128, 128) zero-padded weight (static idx)
            gb = v_ref[i]           # (2, 128): row 0 = gamma, row 1 = beta
            gamma = gb[0:1, :]
            beta = gb[1:2, :]
            # Linear (bias dropped: exactly cancelled by following training-BN).
            x = jnp.dot(x, w, preferred_element_type=jnp.float32)
            # BatchNorm1d affine.
            x = standardize(x) * gamma + beta
            if i != num_layers - 1:
                x = jnp.maximum(x, 0.0)   # relu; dropout p=0.0 -> identity

        out_ref[...] = x.astype(out_ref.dtype)

    return kernel


def cren_forward_samples(xs, w_slab, v_slab, out_dim):
    """xs: (S, N, F) independent forwards (per-sample BN stats) -> (S, N, out_dim)."""
    s_dim, n, f = xs.shape
    num_layers = w_slab.shape[0]
    if f < LANE:
        xs = jnp.pad(xs, ((0, 0), (0, 0), (0, LANE - f)))

    out = pl.pallas_call(
        make_cren_kernel(num_layers, n),
        out_shape=jax.ShapeDtypeStruct((s_dim, n, LANE), jnp.float32),
        grid=(s_dim,),
        in_specs=[
            pl.BlockSpec((None, n, LANE), lambda s: (s, 0, 0)),            # x per sample
            pl.BlockSpec((num_layers, LANE, LANE), lambda s: (0, 0, 0)),   # weights resident
            pl.BlockSpec((num_layers, 2, LANE), lambda s: (0, 0, 0)),      # gamma/beta resident
        ],
        out_specs=pl.BlockSpec((None, n, LANE), lambda s: (s, 0, 0)),
        compiler_params=pltpu.CompilerParams(
            dimension_semantics=("parallel",),
            vmem_limit_bytes=32 * 1024 * 1024,
        ),
    )(xs, w_slab, v_slab)
    # Lane-dense (N,128) store inside the kernel; slice to the real width here.
    return out[:, :, :out_dim]


def cren_forward(x, w_slab, v_slab, out_dim):
    """Single (N, F) batch -> (N, out_dim) via the same gridded kernel (S=1)."""
    return cren_forward_samples(x[None], w_slab, v_slab, out_dim)[0]


def pack_params(params):
    """Pack all parameters into two lane-dense slabs.

    w_slab[i]: (128,128) zero-padded Linear weight; layer 0 has the input-BN
               gamma0 folded in (diag(gamma0) @ W0).
    v_slab[i]: (2,128)   zero-padded (gamma_i, beta_i) of the BN after layer i.
    Linear biases and beta0 are intentionally dropped: they are per-column
    constants exactly cancelled by the next training-mode BN's mean subtraction
    (dropout p=0 in this config, so nothing sits between Linear and BN).
    """
    ws = params["W"]
    num_layers = len(ws)
    gamma0 = params["gamma0"].reshape(-1)

    w_slab = jnp.zeros((num_layers, LANE, LANE), jnp.float32)
    v_slab = jnp.zeros((num_layers, 2, LANE), jnp.float32)
    for i, w in enumerate(ws):
        k, m = w.shape
        wi = gamma0[:, None] * w if i == 0 else w
        w_slab = w_slab.at[i, :k, :m].set(wi)
        v_slab = v_slab.at[i, 0, :m].set(params["gamma"][i].reshape(-1))
        v_slab = v_slab.at[i, 1, :m].set(params["beta"][i].reshape(-1))
    return w_slab, v_slab


def init_params(key, input_nodes, hidden_layers):
    """Deterministic synthetic parameters (torch.nn.Linear-style bounds; BN
       affine params randomized so the folding optimizations are exercised)."""
    key, kg0, kb0 = jax.random.split(key, 3)
    params = {
        "gamma0": jax.random.uniform(kg0, (1, input_nodes), jnp.float32, 0.5, 1.5),
        "beta0": 0.1 * jax.random.normal(kb0, (1, input_nodes), jnp.float32),
        "W": [], "b": [], "gamma": [], "beta": [],
    }
    in_dim = input_nodes
    for out_dim in hidden_layers:
        key, kw, kb, kg, kbe = jax.random.split(key, 5)
        bound = 1.0 / float(in_dim) ** 0.5
        params["W"].append(
            jax.random.uniform(kw, (in_dim, out_dim), jnp.float32, -bound, bound))
        params["b"].append(
            jax.random.uniform(kb, (1, out_dim), jnp.float32, -bound, bound))
        params["gamma"].append(
            jax.random.uniform(kg, (1, out_dim), jnp.float32, 0.5, 1.5))
        params["beta"].append(
            0.1 * jax.random.normal(kbe, (1, out_dim), jnp.float32))
        in_dim = out_dim
    return params


def _batchnorm_ref(x, gamma, beta):
    mean = jnp.mean(x, axis=0, keepdims=True)
    var = jnp.mean((x - mean) ** 2, axis=0, keepdims=True)
    return (x - mean) * jax.lax.rsqrt(var + BN_EPS) * gamma + beta


def reference_forward(x, params):
    """Pure-JAX reference matching the PyTorch forward (unfolded params/biases)."""
    h = _batchnorm_ref(x, params["gamma0"], params["beta0"])
    num_layers = len(params["W"])
    for i in range(num_layers):
        h = h @ params["W"][i] + params["b"][i]
        h = _batchnorm_ref(h, params["gamma"][i], params["beta"][i])
        if i != num_layers - 1:
            h = jnp.maximum(h, 0.0)
    return h


if __name__ == "__main__":
    batch = 8
    input_nodes = 16
    hidden_layers = [32, 32, 16, 8]
    num_samples = 4

    key = jax.random.PRNGKey(0)
    key, kx = jax.random.split(key)
    xs = jax.random.normal(kx, (num_samples, batch, input_nodes), jnp.float32)
    params = init_params(key, input_nodes, hidden_layers)
    w_slab, v_slab = pack_params(params)

    # Multi-sample (grid) path: params stay VMEM-resident across samples.
    ys = cren_forward_samples(xs, w_slab, v_slab, hidden_layers[-1])
    ys = jax.block_until_ready(ys)
    assert ys.shape == (num_samples, batch, hidden_layers[-1])
    for s in range(num_samples):
        y_ref = reference_forward(xs[s], params)
        assert jnp.allclose(ys[s], y_ref, atol=1e-4, rtol=1e-4), f"mismatch @ sample {s}"

    # Single-batch path (same kernel, S=1 grid).
    y = cren_forward(xs[0], w_slab, v_slab, hidden_layers[-1])
    y = jax.block_until_ready(y)
    assert jnp.allclose(y, reference_forward(xs[0], params), atol=1e-4, rtol=1e-4)

    print("KERNEL_OK")
</pallas_src>

<mosaic_0001>
module attributes {stable_mosaic.version = 11 : i64} {
  func.func @kernel(%arg0: i32, %arg1: memref<1x8x128xf32, #tpu.memory_space<vmem>>, %arg2: memref<4x128x128xf32, #tpu.memory_space<vmem>>, %arg3: memref<4x2x128xf32, #tpu.memory_space<vmem>>, %arg4: memref<1x8x128xf32, #tpu.memory_space<vmem>>) attributes {dimension_semantics = [#tpu.dimension_semantics<parallel>], iteration_bounds = array<i64: 4>, scalar_prefetch = 0 : i64, scratch_operands = 0 : i64, tpu.core_type = #tpu.core_type<tc>, window_params = [{transform_indices = @transform_0, window_bounds = array<i64: 1, 8, 128>}, {pipeline_mode = #tpu.pipeline_mode<synchronous>, transform_indices = @transform_1, window_bounds = array<i64: 4, 128, 128>}, {pipeline_mode = #tpu.pipeline_mode<synchronous>, transform_indices = @transform_2, window_bounds = array<i64: 4, 2, 128>}, {transform_indices = @transform_3, window_bounds = array<i64: 1, 8, 128>}]} {
    %cst = arith.constant 1.250000e-01 : f32
    %0 = vector.broadcast %cst : f32 to vector<1x8xf32>
    %c0 = arith.constant 0 : index
    %c0_0 = arith.constant 0 : index
    %c0_1 = arith.constant 0 : index
    %1 = vector.load %arg1[%c0, %c0_0, %c0_1] : memref<1x8x128xf32, #tpu.memory_space<vmem>>, vector<1x8x128xf32>
    %2 = vector.shape_cast %1 : vector<1x8x128xf32> to vector<8x128xf32>
    %cst_2 = arith.constant dense<0.000000e+00> : vector<1x128xf32>
    %3 = tpu.matmul %0, %2, %cst_2 {dimension_numbers = #tpu.dot_dimension_numbers<[1], [0], [0], [1], [0, 0, 1, 1], [], []>} : vector<1x8xf32>, vector<8x128xf32>, vector<1x128xf32> -> vector<1x128xf32>
    %4 = vector.broadcast %3 : vector<1x128xf32> to vector<8x128xf32>
    %5 = arith.subf %2, %4 : vector<8x128xf32>
    %6 = arith.mulf %5, %5 : vector<8x128xf32>
    %cst_3 = arith.constant dense<0.000000e+00> : vector<1x128xf32>
    %7 = tpu.matmul %0, %6, %cst_3 {dimension_numbers = #tpu.dot_dimension_numbers<[1], [0], [0], [1], [0, 0, 1, 1], [], []>} : vector<1x8xf32>, vector<8x128xf32>, vector<1x128xf32> -> vector<1x128xf32>
    %cst_4 = arith.constant 9.99999974E-6 : f32
    %8 = vector.broadcast %cst_4 : f32 to vector<1x128xf32>
    %9 = arith.addf %7, %8 : vector<1x128xf32>
    %10 = math.rsqrt %9 : vector<1x128xf32>
    %11 = vector.broadcast %10 : vector<1x128xf32> to vector<8x128xf32>
    %12 = arith.mulf %5, %11 : vector<8x128xf32>
    %c0_5 = arith.constant 0 : index
    %c0_6 = arith.constant 0 : index
    %c0_7 = arith.constant 0 : index
    %13 = vector.load %arg2[%c0_5, %c0_6, %c0_7] : memref<4x128x128xf32, #tpu.memory_space<vmem>>, vector<1x128x128xf32>
    %14 = vector.shape_cast %13 : vector<1x128x128xf32> to vector<128x128xf32>
    %c0_8 = arith.constant 0 : index
    %c0_9 = arith.constant 0 : index
    %c0_10 = arith.constant 0 : index
    %15 = vector.load %arg3[%c0_8, %c0_9, %c0_10] : memref<4x2x128xf32, #tpu.memory_space<vmem>>, vector<1x2x128xf32>
    %16 = vector.shape_cast %15 : vector<1x2x128xf32> to vector<2x128xf32>
    %17 = vector.extract_strided_slice %16 {offsets = [0, 0], sizes = [1, 128], strides = [1, 1]} : vector<2x128xf32> to vector<1x128xf32>
    %18 = vector.extract_strided_slice %16 {offsets = [1, 0], sizes = [1, 128], strides = [1, 1]} : vector<2x128xf32> to vector<1x128xf32>
    %cst_11 = arith.constant dense<0.000000e+00> : vector<8x128xf32>
    %19 = tpu.matmul %12, %14, %cst_11 {dimension_numbers = #tpu.dot_dimension_numbers<[1], [0], [0], [1], [0, 0, 1, 1], [], []>} : vector<8x128xf32>, vector<128x128xf32>, vector<8x128xf32> -> vector<8x128xf32>
    %cst_12 = arith.constant dense<0.000000e+00> : vector<1x128xf32>
    %20 = tpu.matmul %0, %19, %cst_12 {dimension_numbers = #tpu.dot_dimension_numbers<[1], [0], [0], [1], [0, 0, 1, 1], [], []>} : vector<1x8xf32>, vector<8x128xf32>, vector<1x128xf32> -> vector<1x128xf32>
    %21 = vector.broadcast %20 : vector<1x128xf32> to vector<8x128xf32>
    %22 = arith.subf %19, %21 : vector<8x128xf32>
    %23 = arith.mulf %22, %22 : vector<8x128xf32>
    %cst_13 = arith.constant dense<0.000000e+00> : vector<1x128xf32>
    %24 = tpu.matmul %0, %23, %cst_13 {dimension_numbers = #tpu.dot_dimension_numbers<[1], [0], [0], [1], [0, 0, 1, 1], [], []>} : vector<1x8xf32>, vector<8x128xf32>, vector<1x128xf32> -> vector<1x128xf32>
    %cst_14 = arith.constant 9.99999974E-6 : f32
    %25 = vector.broadcast %cst_14 : f32 to vector<1x128xf32>
    %26 = arith.addf %24, %25 : vector<1x128xf32>
    %27 = math.rsqrt %26 : vector<1x128xf32>
    %28 = vector.broadcast %27 : vector<1x128xf32> to vector<8x128xf32>
    %29 = arith.mulf %22, %28 : vector<8x128xf32>
    %30 = vector.broadcast %17 : vector<1x128xf32> to vector<8x128xf32>
    %31 = arith.mulf %29, %30 : vector<8x128xf32>
    %32 = vector.broadcast %18 : vector<1x128xf32> to vector<8x128xf32>
    %33 = arith.addf %31, %32 : vector<8x128xf32>
    %cst_15 = arith.constant 0.000000e+00 : f32
    %34 = vector.broadcast %cst_15 : f32 to vector<8x128xf32>
    %35 = arith.maximumf %33, %34 : vector<8x128xf32>
    %c1 = arith.constant 1 : index
    %c0_16 = arith.constant 0 : index
    %c0_17 = arith.constant 0 : index
    %36 = vector.load %arg2[%c1, %c0_16, %c0_17] : memref<4x128x128xf32, #tpu.memory_space<vmem>>, vector<1x128x128xf32>
    %37 = vector.shape_cast %36 : vector<1x128x128xf32> to vector<128x128xf32>
    %c1_18 = arith.constant 1 : index
    %c0_19 = arith.constant 0 : index
    %c0_20 = arith.constant 0 : index
    %38 = vector.load %arg3[%c1_18, %c0_19, %c0_20] : memref<4x2x128xf32, #tpu.memory_space<vmem>>, vector<1x2x128xf32>
    %39 = vector.shape_cast %38 : vector<1x2x128xf32> to vector<2x128xf32>
    %40 = vector.extract_strided_slice %39 {offsets = [0, 0], sizes = [1, 128], strides = [1, 1]} : vector<2x128xf32> to vector<1x128xf32>
    %41 = vector.extract_strided_slice %39 {offsets = [1, 0], sizes = [1, 128], strides = [1, 1]} : vector<2x128xf32> to vector<1x128xf32>
    %cst_21 = arith.constant dense<0.000000e+00> : vector<8x128xf32>
    %42 = tpu.matmul %35, %37, %cst_21 {dimension_numbers = #tpu.dot_dimension_numbers<[1], [0], [0], [1], [0, 0, 1, 1], [], []>} : vector<8x128xf32>, vector<128x128xf32>, vector<8x128xf32> -> vector<8x128xf32>
    %cst_22 = arith.constant dense<0.000000e+00> : vector<1x128xf32>
    %43 = tpu.matmul %0, %42, %cst_22 {dimension_numbers = #tpu.dot_dimension_numbers<[1], [0], [0], [1], [0, 0, 1, 1], [], []>} : vector<1x8xf32>, vector<8x128xf32>, vector<1x128xf32> -> vector<1x128xf32>
    %44 = vector.broadcast %43 : vector<1x128xf32> to vector<8x128xf32>
    %45 = arith.subf %42, %44 : vector<8x128xf32>
    %46 = arith.mulf %45, %45 : vector<8x128xf32>
    %cst_23 = arith.constant dense<0.000000e+00> : vector<1x128xf32>
    %47 = tpu.matmul %0, %46, %cst_23 {dimension_numbers = #tpu.dot_dimension_numbers<[1], [0], [0], [1], [0, 0, 1, 1], [], []>} : vector<1x8xf32>, vector<8x128xf32>, vector<1x128xf32> -> vector<1x128xf32>
    %cst_24 = arith.constant 9.99999974E-6 : f32
    %48 = vector.broadcast %cst_24 : f32 to vector<1x128xf32>
    %49 = arith.addf %47, %48 : vector<1x128xf32>
    %50 = math.rsqrt %49 : vector<1x128xf32>
    %51 = vector.broadcast %50 : vector<1x128xf32> to vector<8x128xf32>
    %52 = arith.mulf %45, %51 : vector<8x128xf32>
    %53 = vector.broadcast %40 : vector<1x128xf32> to vector<8x128xf32>
    %54 = arith.mulf %52, %53 : vector<8x128xf32>
    %55 = vector.broadcast %41 : vector<1x128xf32> to vector<8x128xf32>
    %56 = arith.addf %54, %55 : vector<8x128xf32>
    %cst_25 = arith.constant 0.000000e+00 : f32
    %57 = vector.broadcast %cst_25 : f32 to vector<8x128xf32>
    %58 = arith.maximumf %56, %57 : vector<8x128xf32>
    %c2 = arith.constant 2 : index
    %c0_26 = arith.constant 0 : index
    %c0_27 = arith.constant 0 : index
    %59 = vector.load %arg2[%c2, %c0_26, %c0_27] : memref<4x128x128xf32, #tpu.memory_space<vmem>>, vector<1x128x128xf32>
    %60 = vector.shape_cast %59 : vector<1x128x128xf32> to vector<128x128xf32>
    %c2_28 = arith.constant 2 : index
    %c0_29 = arith.constant 0 : index
    %c0_30 = arith.constant 0 : index
    %61 = vector.load %arg3[%c2_28, %c0_29, %c0_30] : memref<4x2x128xf32, #tpu.memory_space<vmem>>, vector<1x2x128xf32>
    %62 = vector.shape_cast %61 : vector<1x2x128xf32> to vector<2x128xf32>
    %63 = vector.extract_strided_slice %62 {offsets = [0, 0], sizes = [1, 128], strides = [1, 1]} : vector<2x128xf32> to vector<1x128xf32>
    %64 = vector.extract_strided_slice %62 {offsets = [1, 0], sizes = [1, 128], strides = [1, 1]} : vector<2x128xf32> to vector<1x128xf32>
    %cst_31 = arith.constant dense<0.000000e+00> : vector<8x128xf32>
    %65 = tpu.matmul %58, %60, %cst_31 {dimension_numbers = #tpu.dot_dimension_numbers<[1], [0], [0], [1], [0, 0, 1, 1], [], []>} : vector<8x128xf32>, vector<128x128xf32>, vector<8x128xf32> -> vector<8x128xf32>
    %cst_32 = arith.constant dense<0.000000e+00> : vector<1x128xf32>
    %66 = tpu.matmul %0, %65, %cst_32 {dimension_numbers = #tpu.dot_dimension_numbers<[1], [0], [0], [1], [0, 0, 1, 1], [], []>} : vector<1x8xf32>, vector<8x128xf32>, vector<1x128xf32> -> vector<1x128xf32>
    %67 = vector.broadcast %66 : vector<1x128xf32> to vector<8x128xf32>
    %68 = arith.subf %65, %67 : vector<8x128xf32>
    %69 = arith.mulf %68, %68 : vector<8x128xf32>
    %cst_33 = arith.constant dense<0.000000e+00> : vector<1x128xf32>
    %70 = tpu.matmul %0, %69, %cst_33 {dimension_numbers = #tpu.dot_dimension_numbers<[1], [0], [0], [1], [0, 0, 1, 1], [], []>} : vector<1x8xf32>, vector<8x128xf32>, vector<1x128xf32> -> vector<1x128xf32>
    %cst_34 = arith.constant 9.99999974E-6 : f32
    %71 = vector.broadcast %cst_34 : f32 to vector<1x128xf32>
    %72 = arith.addf %70, %71 : vector<1x128xf32>
    %73 = math.rsqrt %72 : vector<1x128xf32>
    %74 = vector.broadcast %73 : vector<1x128xf32> to vector<8x128xf32>
    %75 = arith.mulf %68, %74 : vector<8x128xf32>
    %76 = vector.broadcast %63 : vector<1x128xf32> to vector<8x128xf32>
    %77 = arith.mulf %75, %76 : vector<8x128xf32>
    %78 = vector.broadcast %64 : vector<1x128xf32> to vector<8x128xf32>
    %79 = arith.addf %77, %78 : vector<8x128xf32>
    %cst_35 = arith.constant 0.000000e+00 : f32
    %80 = vector.broadcast %cst_35 : f32 to vector<8x128xf32>
    %81 = arith.maximumf %79, %80 : vector<8x128xf32>
    %c3 = arith.constant 3 : index
    %c0_36 = arith.constant 0 : index
    %c0_37 = arith.constant 0 : index
    %82 = vector.load %arg2[%c3, %c0_36, %c0_37] : memref<4x128x128xf32, #tpu.memory_space<vmem>>, vector<1x128x128xf32>
    %83 = vector.shape_cast %82 : vector<1x128x128xf32> to vector<128x128xf32>
    %c3_38 = arith.constant 3 : index
    %c0_39 = arith.constant 0 : index
    %c0_40 = arith.constant 0 : index
    %84 = vector.load %arg3[%c3_38, %c0_39, %c0_40] : memref<4x2x128xf32, #tpu.memory_space<vmem>>, vector<1x2x128xf32>
    %85 = vector.shape_cast %84 : vector<1x2x128xf32> to vector<2x128xf32>
    %86 = vector.extract_strided_slice %85 {offsets = [0, 0], sizes = [1, 128], strides = [1, 1]} : vector<2x128xf32> to vector<1x128xf32>
    %87 = vector.extract_strided_slice %85 {offsets = [1, 0], sizes = [1, 128], strides = [1, 1]} : vector<2x128xf32> to vector<1x128xf32>
    %cst_41 = arith.constant dense<0.000000e+00> : vector<8x128xf32>
    %88 = tpu.matmul %81, %83, %cst_41 {dimension_numbers = #tpu.dot_dimension_numbers<[1], [0], [0], [1], [0, 0, 1, 1], [], []>} : vector<8x128xf32>, vector<128x128xf32>, vector<8x128xf32> -> vector<8x128xf32>
    %cst_42 = arith.constant dense<0.000000e+00> : vector<1x128xf32>
    %89 = tpu.matmul %0, %88, %cst_42 {dimension_numbers = #tpu.dot_dimension_numbers<[1], [0], [0], [1], [0, 0, 1, 1], [], []>} : vector<1x8xf32>, vector<8x128xf32>, vector<1x128xf32> -> vector<1x128xf32>
    %90 = vector.broadcast %89 : vector<1x128xf32> to vector<8x128xf32>
    %91 = arith.subf %88, %90 : vector<8x128xf32>
    %92 = arith.mulf %91, %91 : vector<8x128xf32>
    %cst_43 = arith.constant dense<0.000000e+00> : vector<1x128xf32>
    %93 = tpu.matmul %0, %92, %cst_43 {dimension_numbers = #tpu.dot_dimension_numbers<[1], [0], [0], [1], [0, 0, 1, 1], [], []>} : vector<1x8xf32>, vector<8x128xf32>, vector<1x128xf32> -> vector<1x128xf32>
    %cst_44 = arith.constant 9.99999974E-6 : f32
    %94 = vector.broadcast %cst_44 : f32 to vector<1x128xf32>
    %95 = arith.addf %93, %94 : vector<1x128xf32>
    %96 = math.rsqrt %95 : vector<1x128xf32>
    %97 = vector.broadcast %96 : vector<1x128xf32> to vector<8x128xf32>
    %98 = arith.mulf %91, %97 : vector<8x128xf32>
    %99 = vector.broadcast %86 : vector<1x128xf32> to vector<8x128xf32>
    %100 = arith.mulf %98, %99 : vector<8x128xf32>
    %101 = vector.broadcast %87 : vector<1x128xf32> to vector<8x128xf32>
    %102 = arith.addf %100, %101 : vector<8x128xf32>
    %c0_45 = arith.constant 0 : index
    %c0_46 = arith.constant 0 : index
    %c0_47 = arith.constant 0 : index
    %103 = vector.load %arg4[%c0_45, %c0_46, %c0_47] : memref<1x8x128xf32, #tpu.memory_space<vmem>>, vector<1x8x128xf32>
    %104 = vector.shape_cast %103 : vector<1x8x128xf32> to vector<8x128xf32>
    %105 = vector.shape_cast %102 : vector<8x128xf32> to vector<1x8x128xf32>
    tpu.vector_store %arg4[%c0_45, %c0_46, %c0_47], %105 {strides = array<i32>} : memref<1x8x128xf32, #tpu.memory_space<vmem>>, vector<1x8x128xf32>,
    return
  }
  func.func @transform_0(%arg0: i32) -> (i32, i32, i32) {
    %c0_i32 = arith.constant 0 : i32
    %c0_i32_0 = arith.constant 0 : i32
    %c0_i32_1 = arith.constant 0 : i32
    return %arg0, %c0_i32, %c0_i32_0 : i32, i32, i32
  }
  func.func @transform_1(%arg0: i32) -> (i32, i32, i32) {
    %c0_i32 = arith.constant 0 : i32
    %c0_i32_0 = arith.constant 0 : i32
    %c0_i32_1 = arith.constant 0 : i32
    %c0_i32_2 = arith.constant 0 : i32
    return %c0_i32, %c0_i32_0, %c0_i32_1 : i32, i32, i32
  }
  func.func @transform_2(%arg0: i32) -> (i32, i32, i32) {
    %c0_i32 = arith.constant 0 : i32
    %c0_i32_0 = arith.constant 0 : i32
    %c0_i32_1 = arith.constant 0 : i32
    %c0_i32_2 = arith.constant 0 : i32
    return %c0_i32, %c0_i32_0, %c0_i32_1 : i32, i32, i32
  }
  func.func @transform_3(%arg0: i32) -> (i32, i32, i32) {
    %c0_i32 = arith.constant 0 : i32
    %c0_i32_0 = arith.constant 0 : i32
    %c0_i32_1 = arith.constant 0 : i32
    return %arg0, %c0_i32, %c0_i32_0 : i32, i32, i32
  }
}

</mosaic_0001>

<llo_original>
// kernel: tpu_custom_call.1
$region0: #{tpu_custom_call.1}
  #allocation0 [shape = 'u32[]', space=smem, size = 0x4, offset = 0x4, fixed_abs, tag = 'smem constant byte address 0x4 - core index']
  #allocation1 [shape = 'u32[144,128]{1,0:T(1,128)}', space=vmem, size = 0x12000, scoped, tag = 'internal scratch']
  %s0 = inlined_call_operand.hbm [shape: f32[4,8,128], index: 0, kind: input, shape index: {}]
  %s1 = inlined_call_operand.hbm [shape: f32[4,128,128], index: 1, kind: input, shape index: {}]
  %s2 = inlined_call_operand.hbm [shape: f32[4,2,128], index: 2, kind: input, shape index: {}]
  %s3 = inlined_call_operand.hbm [shape: f32[4,8,128], index: 3, kind: output, shape index: {}]
  %s4 = sld [smem:[#allocation0]]
  $region57: #{tpu_custom_call.1} parent=0
    _
  %s6 = ssub.s32 1, %s4
  %s7 = scalar_select 0, %s6, %s4
  $region1: #{tpu_custom_call.1} parent=0
    #allocation2 [shape = 'u8[8192]{0}', space=vmem, size = 0x2000, scoped, tag = 'input window, operand 0']
    #allocation3 [shape = 's32[2]{0}', space=sflag, size = 0x8, scoped, tag = 'scoped memory for tpu_custom_call.1']
    #allocation4 [shape = 's32[2]{0}', space=sflag, size = 0x8, scoped, tag = 'scoped memory for tpu_custom_call.1']
    #allocation5 [shape = 'u8[262144]{0}', space=vmem, size = 0x40000, scoped, tag = 'input window, operand 1, single buffered']
    #allocation6 [shape = 's32[1]{0}', space=sflag, size = 0x4, scoped, tag = 'scoped memory for tpu_custom_call.1']
    #allocation7 [shape = 'u8[4096]{0}', space=vmem, size = 0x1000, scoped, tag = 'input window, operand 2, single buffered']
    #allocation8 [shape = 'u8[8192]{0}', space=vmem, size = 0x2000, scoped, tag = 'output window, operand 0']
    %8 = vsyncpa [#allocation3], 0
    %s9 = scalar_lea.sflag [#allocation3], 1
    %10 = vsyncpa %s9, 0
    %11 = vsyncpa [#allocation6], 0
    %12 = vsyncpa [#allocation4], 0
    %s13 = scalar_lea.sflag [#allocation4], 1
    %14 = vsyncpa %s13, 0
    loop: start=0, step=1, limit=6
    $region2: #{tpu_custom_call.1} parent=1 // loop_pre_header
      _
    $region3: #{tpu_custom_call.1} parent=1 // loop_header
      %s16 = sphi 0, %s20
      %p17 = scmp.ge.s32.totalorder %s16, 6
      %s26 = sphi 0, %s28
      %s29 = sphi 0, %s26
      %s30 = sphi 0, %s29
      %s46 = sphi 0, %s30
      %s50 = sphi 0, %s50
      %s52 = sphi 0, %s50
      %s53 = sphi 0, %s52
      %s67 = sphi 0, %s53
      %s71 = sphi 0, %s71
      %s73 = sphi 0, %s71
      %s74 = sphi 0, %s73
      %s88 = sphi 0, %s74
      %s94 = sphi 0, %s96
      %s97 = sphi 0, %s94
      %s98 = sphi 0, %s97
      %s114 = sphi 0, %s98
    $region4: #{tpu_custom_call.1} parent=1 // loop_header_branch
      %19 = sbr.rel (%p17) target = $region8
    $region5: #{tpu_custom_call.1} parent=1 // loop_body
      %s21 = ssub.s32 %s16, 1
      %s22 = ssub.s32 %s16, 2
      %s23 = sadd.s32 %s16, 1
      %s24 = ssub.s32 %s16, %s23
      %p25 = scmp.eq.s32.totalorder %s24, 0
      %s27 = sadd.s32 %s26, 1
      %s28 = scalar_select %p25, %s26, %s27
      %p31 = pneg %p25
      %p32 = scmp.eq.s32.totalorder %s16, 3
      %p33 = por %p31, %p32
      %p34 = scmp.ne.s32.totalorder %s26, %s29
      %p35 = scmp.eq.s32.totalorder %s16, 0
      %p36 = por %p34, %p35
      %p37 = scmp.ne.s32.totalorder %s26, %s29
      %p38 = scmp.eq.s32.totalorder %s21, 3
      %p39 = por %p37, %p38
      %p40 = scmp.ne.s32.totalorder %s29, %s30
      %p41 = scmp.eq.s32.totalorder %s21, 0
      %p42 = por %p40, %p41
      %p43 = scmp.ne.s32.totalorder %s29, %s30
      %p44 = scmp.eq.s32.totalorder %s22, 3
      %p45 = por %p43, %p44
      %p47 = scmp.ne.s32.totalorder %s30, %s46
      %p48 = scmp.eq.s32.totalorder %s22, 0
      %p49 = por %p47, %p48
      %s51 = sadd.s32 %s50, 1
      %p54 = scmp.eq.s32.totalorder %s16, 3
      %p55 = scmp.ne.s32.totalorder %s50, %s52
      %p56 = scmp.eq.s32.totalorder %s16, 0
      %p57 = por %p55, %p56
      %p58 = scmp.ne.s32.totalorder %s50, %s52
      %p59 = scmp.eq.s32.totalorder %s21, 3
      %p60 = por %p58, %p59
      %p61 = scmp.ne.s32.totalorder %s52, %s53
      %p62 = scmp.eq.s32.totalorder %s21, 0
      %p63 = por %p61, %p62
      %p64 = scmp.ne.s32.totalorder %s52, %s53
      %p65 = scmp.eq.s32.totalorder %s22, 3
      %p66 = por %p64, %p65
      %p68 = scmp.ne.s32.totalorder %s53, %s67
      %p69 = scmp.eq.s32.totalorder %s22, 0
      %p70 = por %p68, %p69
      %s72 = sadd.s32 %s71, 1
      %p75 = scmp.eq.s32.totalorder %s16, 3
      %p76 = scmp.ne.s32.totalorder %s71, %s73
      %p77 = scmp.eq.s32.totalorder %s16, 0
      %p78 = por %p76, %p77
      %p79 = scmp.ne.s32.totalorder %s71, %s73
      %p80 = scmp.eq.s32.totalorder %s21, 3
      %p81 = por %p79, %p80
      %p82 = scmp.ne.s32.totalorder %s73, %s74
      %p83 = scmp.eq.s32.totalorder %s21, 0
      %p84 = por %p82, %p83
      %p85 = scmp.ne.s32.totalorder %s73, %s74
      %p86 = scmp.eq.s32.totalorder %s22, 3
      %p87 = por %p85, %p86
      %p89 = scmp.ne.s32.totalorder %s74, %s88
      %p90 = scmp.eq.s32.totalorder %s22, 0
      %p91 = por %p89, %p90
      %s92 = ssub.s32 %s16, %s23
      %p93 = scmp.eq.s32.totalorder %s92, 0
      %s95 = sadd.s32 %s94, 1
      %s96 = scalar_select %p93, %s94, %s95
      %p99 = pneg %p93
      %p100 = scmp.eq.s32.totalorder %s16, 3
      %p101 = por %p99, %p100
      %p102 = scmp.ne.s32.totalorder %s94, %s97
      %p103 = scmp.eq.s32.totalorder %s16, 0
      %p104 = por %p102, %p103
      %p105 = scmp.ne.s32.totalorder %s94, %s97
      %p106 = scmp.eq.s32.totalorder %s21, 3
      %p107 = por %p105, %p106
      %p108 = scmp.ne.s32.totalorder %s97, %s98
      %p109 = scmp.eq.s32.totalorder %s21, 0
      %p110 = por %p108, %p109
      %p111 = scmp.ne.s32.totalorder %s97, %s98
      %p112 = scmp.eq.s32.totalorder %s22, 3
      %p113 = por %p111, %p112
      %p115 = scmp.ne.s32.totalorder %s98, %s114
      %p116 = scmp.eq.s32.totalorder %s22, 0
      %p117 = por %p115, %p116
      %p118 = scmp.le.s32.totalorder 1, %s16
      %p119 = scmp.lt.s32.totalorder %s16, 5
      %p120 = pnand %p118, %p119
      %p121 = pneg %p120
      // Predicated region
      $region9: #{tpu_custom_call.1} parent=5 // pred_check
        _
      $region10: #{tpu_custom_call.1} parent=5 // pred_check_branch
        %123 = sbr.rel (%p120) target = $region12
      $region11: #{tpu_custom_call.1} parent=5 // pred_region
        %s124 = ssub.s32 %s16, 1
        // Predicated region
        $region13: #{tpu_custom_call.1} parent=11 // pred_check
          %p125 = pneg %p63
        $region14: #{tpu_custom_call.1} parent=11 // pred_check_branch
          %127 = sbr.rel (%p125) target = $region16
        $region15: #{tpu_custom_call.1} parent=11 // pred_region
          %s129 = ssub.s32 8192, 8192
          %130 = vsyncadd [#allocation6], %s129
          %s131 = sshll.u32 [#allocation5], 4
          %s132 = int_to_ptr.vmem [resolvable:$true] %s131
          %137 = dma.hbm_to_vmem [thread:$0]  %s1, 8192, %s132, [#allocation6], 128, 128, 8
        $region16: #{tpu_custom_call.1} parent=11 // pred_fallthru
          _
        // Predicated region
        $region17: #{tpu_custom_call.1} parent=11 // pred_check
          %p138 = pneg %p84
        $region18: #{tpu_custom_call.1} parent=11 // pred_check_branch
          %140 = sbr.rel (%p138) target = $region20
        $region19: #{tpu_custom_call.1} parent=11 // pred_region
          %s142 = ssub.s32 128, 128
          %143 = vsyncadd [#allocation6], %s142
          %s144 = sshll.u32 [#allocation7], 4
          %s145 = int_to_ptr.vmem [resolvable:$true] %s144
          %150 = dma.hbm_to_vmem [thread:$0]  %s2, 128, %s145, [#allocation6], 32, 32, 2
        $region20: #{tpu_custom_call.1} parent=11 // pred_fallthru
          _
      $region12: #{tpu_custom_call.1} parent=5 // pred_fallthru
        _
      %p151 = scmp.lt.s32.totalorder %s16, 4
      // Predicated region
      $region21: #{tpu_custom_call.1} parent=5 // pred_check
        %p152 = pneg %p151
      $region22: #{tpu_custom_call.1} parent=5 // pred_check_branch
        %154 = sbr.rel (%p152) target = $region24
      $region23: #{tpu_custom_call.1} parent=5 // pred_region
        // Predicated region
        $region25: #{tpu_custom_call.1} parent=23 // pred_check
          %p155 = pneg %p36
        $region26: #{tpu_custom_call.1} parent=23 // pred_check_branch
          %157 = sbr.rel (%p155) target = $region28
        $region27: #{tpu_custom_call.1} parent=23 // pred_region
          %s158 = sand.u32 %s26, 1
          %s159 = scalar_lea.sflag [#allocation3], %s158
          %s160 = sand.u32 %s26, 1
          %s161 = smul.addr %s160, 8
          %s162 = scalar_lea.vmem [#allocation2], %s161
          %s164 = ssub.s32 128, 128
          %165 = vsyncadd %s159, %s164
          %s166 = smul.addr %s16, 128
          %s167 = scalar_lea.hbm %s0, %s166
          %s169 = sshll.u32 %s162, 4
          %s170 = int_to_ptr.vmem [resolvable:$true] %s169
          %172 = dma.hbm_to_vmem [thread:$0]  %s167, 128, %s170, %s159
        $region28: #{tpu_custom_call.1} parent=23 // pred_fallthru
          _
      $region24: #{tpu_custom_call.1} parent=5 // pred_fallthru
        _
      %p173 = scmp.le.s32.totalorder 1, %s16
      %p174 = scmp.lt.s32.totalorder %s16, 5
      %p175 = pnand %p173, %p174
      %p176 = pneg %p175
      // Predicated region
      $region29: #{tpu_custom_call.1} parent=5 // pred_check
        _
      $region30: #{tpu_custom_call.1} parent=5 // pred_check_branch
        %178 = sbr.rel (%p175) target = $region32
      $region31: #{tpu_custom_call.1} parent=5 // pred_region
        %s179 = ssub.s32 %s16, 1
        %s180 = sand.u32 %s29, 1
        %s181 = scalar_lea.sflag [#allocation3], %s180
        %s182 = sand.u32 %s29, 1
        %s183 = smul.addr %s182, 8
        %s184 = scalar_lea.vmem [#allocation2], %s183
        // Predicated region
        $region33: #{tpu_custom_call.1} parent=31 // pred_check
          %p185 = pneg %p42
        $region34: #{tpu_custom_call.1} parent=31 // pred_check_branch
          %187 = sbr.rel (%p185) target = $region36
        $region35: #{tpu_custom_call.1} parent=31 // pred_region
          %188 = dma.done %s181, 128
        $region36: #{tpu_custom_call.1} parent=31 // pred_fallthru
          _
        // Predicated region
        $region37: #{tpu_custom_call.1} parent=31 // pred_check
          %p189 = pneg %p63
        $region38: #{tpu_custom_call.1} parent=31 // pred_check_branch
          %191 = sbr.rel (%p189) target = $region40
        $region39: #{tpu_custom_call.1} parent=31 // pred_region
          %192 = dma.done [#allocation6], 8192
        $region40: #{tpu_custom_call.1} parent=31 // pred_fallthru
          _
        // Predicated region
        $region41: #{tpu_custom_call.1} parent=31 // pred_check
          %p193 = pneg %p84
        $region42: #{tpu_custom_call.1} parent=31 // pred_check_branch
          %195 = sbr.rel (%p193) target = $region44
        $region43: #{tpu_custom_call.1} parent=31 // pred_region
          %196 = dma.done [#allocation6], 128
        $region44: #{tpu_custom_call.1} parent=31 // pred_fallthru
          _
        %s197 = sand.u32 %s29, 1
        %s198 = scalar_lea.sflag [#allocation3], %s197
        %s199 = sand.u32 %s29, 1
        %s200 = smul.addr %s199, 8
        %s201 = scalar_lea.vmem [#allocation2], %s200
        %p202 = pneg %p42
        %p203 = pneg %p39
        %p204 = pneg %p63
        %p205 = pneg %p60
        %p206 = pneg %p84
        %p207 = pneg %p81
        %p208 = pneg %p110
        %p209 = pneg %p107
        %s210 = sand.u32 %s97, 1
        %s211 = scalar_lea.sflag [#allocation4], %s210
        %s212 = sand.u32 %s97, 1
        %s213 = smul.addr %s212, 8
        %s214 = scalar_lea.vmem [#allocation8], %s213
        %v215 = vld [vmem:[%s184] sm:$0xff]
        %vm216 = vcmask 64512
        %v218 = vsel %vm216, 0.125, 0
        %220 = vmatprep.subr.mxu0 0.0
        %221 = vmatpush1.msra.mxu0 %v215
        %222 = vmatprep.subr.mxu0 0.0
        %223 = vmatpush1.msra.mxu0 0.0
        %224 = vmatprep.subr.mxu0 0.0
        %225 = vmatpush1.msra.mxu0 0.0
        %226 = vmatprep.subr.mxu0 0.0
        %227 = vmatpush1.msra.mxu0 0.0
        %228 = vmatprep.subr.mxu0 0.0
        %229 = vmatpush1.msra.mxu0 0.0
        %230 = vmatprep.subr.mxu0 0.0
        %231 = vmatpush1.msra.mxu0 0.0
        %232 = vmatprep.subr.mxu0 0.0
        %233 = vmatpush1.msra.mxu0 0.0
        %234 = vmatprep.subr.mxu0 0.0
        %235 = vmatpush1.msra.mxu0 0.0
        %236 = vmatprep.subr.mxu0 0.0
        %237 = vmatpush1.msra.mxu0 0.0
        %238 = vmatprep.subr.mxu0 0.0
        %239 = vmatpush1.msra.mxu0 0.0
        %240 = vmatprep.subr.mxu0 0.0
        %241 = vmatpush1.msra.mxu0 0.0
        %242 = vmatprep.subr.mxu0 0.0
        %243 = vmatpush1.msra.mxu0 0.0
        %244 = vmatprep.subr.mxu0 0.0
        %245 = vmatpush1.msra.mxu0 0.0
        %246 = vmatprep.subr.mxu0 0.0
        %247 = vmatpush1.msra.mxu0 0.0
        %248 = vmatprep.subr.mxu0 0.0
        %249 = vmatpush1.msra.mxu0 0.0
        %250 = vmatprep.subr.mxu0 0.0
        %251 = vmatpush1.msra.mxu0 0.0
        %252 = vmatprep.subr.mxu0 0.0
        %253 = vmatpush1.msra.mxu0 0.0
        %254 = vmatprep.subr.mxu0 0.0
        %255 = vmatpush1.msra.mxu0 0.0
        %256 = vmatprep.subr.mxu0 0.0
        %257 = vmatpush1.msra.mxu0 0.0
        %258 = vmatprep.subr.mxu0 0.0
        %259 = vmatpush1.msra.mxu0 0.0
        %260 = vmatprep.subr.mxu0 0.0
        %261 = vmatpush1.msra.mxu0 0.0
        %262 = vmatprep.subr.mxu0 0.0
        %263 = vmatpush1.msra.mxu0 0.0
        %264 = vmatprep.subr.mxu0 0.0
        %265 = vmatpush1.msra.mxu0 0.0
        %266 = vmatprep.subr.mxu0 0.0
        %267 = vmatpush1.msra.mxu0 0.0
        %268 = vmatprep.subr.mxu0 0.0
        %269 = vmatpush1.msra.mxu0 0.0
        %270 = vmatprep.subr.mxu0 0.0
        %271 = vmatpush1.msra.mxu0 0.0
        %272 = vmatprep.subr.mxu0 0.0
        %273 = vmatpush1.msra.mxu0 0.0
        %274 = vmatprep.subr.mxu0 0.0
        %275 = vmatpush1.msra.mxu0 0.0
        %276 = vmatprep.subr.mxu0 0.0
        %277 = vmatpush1.msra.mxu0 0.0
        %278 = vmatprep.subr.mxu0 0.0
        %279 = vmatpush1.msra.mxu0 0.0
        %280 = vmatprep.subr.mxu0 0.0
        %281 = vmatpush1.msra.mxu0 0.0
        %282 = vmatprep.subr.mxu0 0.0
        %283 = vmatpush1.msra.mxu0 0.0
        %284 = vmatprep.mubr.f32.mxu0 0.0
        %285 = vmatmul.mubr.f32.gmra.mrb[0].mxu0 %v218
        %v286 = vpop.f32.mrb[0].mxu0
        %v287 = vadd.f32 0.0, %v286
        %v288 = vpop.f32.mrb[0].mxu0
        %289 = vdwg.mxu0
        %v290 = vlaneseq
        %v291 = vshrl.u32 %v290, 7
        %v292 = vsub.s32 0, %v291
        %v293 = vrot.slane %v287, %v292
        %v294 = vsub.f32 %v215, %v293
        %v295 = vmul.f32 %v294, %v294
        %296 = vmatprep.subr.mxu0 0.0
        %297 = vmatpush1.msra.mxu0 %v295
        %298 = vmatprep.subr.mxu0 0.0
        %299 = vmatpush1.msra.mxu0 0.0
        %300 = vmatprep.subr.mxu0 0.0
        %301 = vmatpush1.msra.mxu0 0.0
        %302 = vmatprep.subr.mxu0 0.0
        %303 = vmatpush1.msra.mxu0 0.0
        %304 = vmatprep.subr.mxu0 0.0
        %305 = vmatpush1.msra.mxu0 0.0
        %306 = vmatprep.subr.mxu0 0.0
        %307 = vmatpush1.msra.mxu0 0.0
        %308 = vmatprep.subr.mxu0 0.0
        %309 = vmatpush1.msra.mxu0 0.0
        %310 = vmatprep.subr.mxu0 0.0
        %311 = vmatpush1.msra.mxu0 0.0
        %312 = vmatprep.subr.mxu0 0.0
        %313 = vmatpush1.msra.mxu0 0.0
        %314 = vmatprep.subr.mxu0 0.0
        %315 = vmatpush1.msra.mxu0 0.0
        %316 = vmatprep.subr.mxu0 0.0
        %317 = vmatpush1.msra.mxu0 0.0
        %318 = vmatprep.subr.mxu0 0.0
        %319 = vmatpush1.msra.mxu0 0.0
        %320 = vmatprep.subr.mxu0 0.0
        %321 = vmatpush1.msra.mxu0 0.0
        %322 = vmatprep.subr.mxu0 0.0
        %323 = vmatpush1.msra.mxu0 0.0
        %324 = vmatprep.subr.mxu0 0.0
        %325 = vmatpush1.msra.mxu0 0.0
        %326 = vmatprep.subr.mxu0 0.0
        %327 = vmatpush1.msra.mxu0 0.0
        %328 = vmatprep.subr.mxu0 0.0
        %329 = vmatpush1.msra.mxu0 0.0
        %330 = vmatprep.subr.mxu0 0.0
        %331 = vmatpush1.msra.mxu0 0.0
        %332 = vmatprep.subr.mxu0 0.0
        %333 = vmatpush1.msra.mxu0 0.0
        %334 = vmatprep.subr.mxu0 0.0
        %335 = vmatpush1.msra.mxu0 0.0
        %336 = vmatprep.subr.mxu0 0.0
        %337 = vmatpush1.msra.mxu0 0.0
        %338 = vmatprep.subr.mxu0 0.0
        %339 = vmatpush1.msra.mxu0 0.0
        %340 = vmatprep.subr.mxu0 0.0
        %341 = vmatpush1.msra.mxu0 0.0
        %342 = vmatprep.subr.mxu0 0.0
        %343 = vmatpush1.msra.mxu0 0.0
        %344 = vmatprep.subr.mxu0 0.0
        %345 = vmatpush1.msra.mxu0 0.0
        %346 = vmatprep.subr.mxu0 0.0
        %347 = vmatpush1.msra.mxu0 0.0
        %348 = vmatprep.subr.mxu0 0.0
        %349 = vmatpush1.msra.mxu0 0.0
        %350 = vmatprep.subr.mxu0 0.0
        %351 = vmatpush1.msra.mxu0 0.0
        %352 = vmatprep.subr.mxu0 0.0
        %353 = vmatpush1.msra.mxu0 0.0
        %354 = vmatprep.subr.mxu0 0.0
        %355 = vmatpush1.msra.mxu0 0.0
        %356 = vmatprep.subr.mxu0 0.0
        %357 = vmatpush1.msra.mxu0 0.0
        %358 = vmatprep.subr.mxu0 0.0
        %359 = vmatpush1.msra.mxu0 0.0
        %360 = vmatprep.mubr.f32.mxu0 0.0
        %361 = vmatmul.mubr.f32.gmra.mrb[0].mxu0 %v218
        %v362 = vpop.f32.mrb[0].mxu0
        %v363 = vadd.f32 1e-05, %v362
        %v364 = vpop.f32.mrb[0].mxu0
        %365 = vdwg.mxu0
        %v366 = vrsqrt.pop %v363
        %v367 = vlaneseq
        %v368 = vshrl.u32 %v367, 7
        %v369 = vsub.s32 0, %v368
        %v370 = vrot.slane %v366, %v369
        %v371 = vmul.f32 %v294, %v370
        %v372 = vld [vmem:[#allocation5] sm:$0xff]
        %v373 = vld [vmem:[#allocation5 + $0x8] sm:$0xff]
        %v374 = vld [vmem:[#allocation5 + $0x10] sm:$0xff]
        %v375 = vld [vmem:[#allocation5 + $0x18] sm:$0xff]
        %v376 = vld [vmem:[#allocation5 + $0x20] sm:$0xff]
        %v377 = vld [vmem:[#allocation5 + $0x28] sm:$0xff]
        %v378 = vld [vmem:[#allocation5 + $0x30] sm:$0xff]
        %v379 = vld [vmem:[#allocation5 + $0x38] sm:$0xff]
        %v380 = vld [vmem:[#allocation5 + $0x40] sm:$0xff]
        %v381 = vld [vmem:[#allocation5 + $0x48] sm:$0xff]
        %v382 = vld [vmem:[#allocation5 + $0x50] sm:$0xff]
        %v383 = vld [vmem:[#allocation5 + $0x58] sm:$0xff]
        %v384 = vld [vmem:[#allocation5 + $0x60] sm:$0xff]
        %v385 = vld [vmem:[#allocation5 + $0x68] sm:$0xff]
        %v386 = vld [vmem:[#allocation5 + $0x70] sm:$0xff]
        %v387 = vld [vmem:[#allocation5 + $0x78] sm:$0xff]
        %v388 = vld [vmem:[#allocation7] sm:$0x3]
        %389 = vmatprep.subr.mxu0 0.0
        %390 = vmatpush1.msra.mxu0 %v372
        %391 = vmatprep.subr.mxu0 0.0
        %392 = vmatpush1.msra.mxu0 %v373
        %393 = vmatprep.subr.mxu0 0.0
        %394 = vmatpush1.msra.mxu0 %v374
        %395 = vmatprep.subr.mxu0 0.0
        %396 = vmatpush1.msra.mxu0 %v375
        %397 = vmatprep.subr.mxu0 0.0
        %398 = vmatpush1.msra.mxu0 %v376
        %399 = vmatprep.subr.mxu0 0.0
        %400 = vmatpush1.msra.mxu0 %v377
        %401 = vmatprep.subr.mxu0 0.0
        %402 = vmatpush1.msra.mxu0 %v378
        %403 = vmatprep.subr.mxu0 0.0
        %404 = vmatpush1.msra.mxu0 %v379
        %405 = vmatprep.subr.mxu0 0.0
        %406 = vmatpush1.msra.mxu0 %v380
        %407 = vmatprep.subr.mxu0 0.0
        %408 = vmatpush1.msra.mxu0 %v381
        %409 = vmatprep.subr.mxu0 0.0
        %410 = vmatpush1.msra.mxu0 %v382
        %411 = vmatprep.subr.mxu0 0.0
        %412 = vmatpush1.msra.mxu0 %v383
        %413 = vmatprep.subr.mxu0 0.0
        %414 = vmatpush1.msra.mxu0 %v384
        %415 = vmatprep.subr.mxu0 0.0
        %416 = vmatpush1.msra.mxu0 %v385
        %417 = vmatprep.subr.mxu0 0.0
        %418 = vmatpush1.msra.mxu0 %v386
        %419 = vmatprep.subr.mxu0 0.0
        %420 = vmatpush1.msra.mxu0 %v387
        %421 = vmatprep.subr.mxu0 0.0
        %422 = vmatpush1.msra.mxu0 0.0
        %423 = vmatprep.subr.mxu0 0.0
        %424 = vmatpush1.msra.mxu0 0.0
        %425 = vmatprep.subr.mxu0 0.0
        %426 = vmatpush1.msra.mxu0 0.0
        %427 = vmatprep.subr.mxu0 0.0
        %428 = vmatpush1.msra.mxu0 0.0
        %429 = vmatprep.subr.mxu0 0.0
        %430 = vmatpush1.msra.mxu0 0.0
        %431 = vmatprep.subr.mxu0 0.0
        %432 = vmatpush1.msra.mxu0 0.0
        %433 = vmatprep.subr.mxu0 0.0
        %434 = vmatpush1.msra.mxu0 0.0
        %435 = vmatprep.subr.mxu0 0.0
        %436 = vmatpush1.msra.mxu0 0.0
        %437 = vmatprep.subr.mxu0 0.0
        %438 = vmatpush1.msra.mxu0 0.0
        %439 = vmatprep.subr.mxu0 0.0
        %440 = vmatpush1.msra.mxu0 0.0
        %441 = vmatprep.subr.mxu0 0.0
        %442 = vmatpush1.msra.mxu0 0.0
        %443 = vmatprep.subr.mxu0 0.0
        %444 = vmatpush1.msra.mxu0 0.0
        %445 = vmatprep.subr.mxu0 0.0
        %446 = vmatpush1.msra.mxu0 0.0
        %447 = vmatprep.subr.mxu0 0.0
        %448 = vmatpush1.msra.mxu0 0.0
        %449 = vmatprep.subr.mxu0 0.0
        %450 = vmatpush1.msra.mxu0 0.0
        %451 = vmatprep.subr.mxu0 0.0
        %452 = vmatpush1.msra.mxu0 0.0
        %453 = vmatprep.mubr.f32.mxu0 0.0
        %454 = vmatmul.mubr.f32.gmra.mrb[0].mxu0 %v371
        %v455 = vpop.f32.mrb[0].mxu0
        %v456 = vadd.f32 0.0, %v455
        %v457 = vpop.f32.mrb[0].mxu0
        %458 = vdwg.mxu0
        %459 = vmatprep.subr.mxu0 0.0
        %460 = vmatpush1.msra.mxu0 %v456
        %461 = vmatprep.subr.mxu0 0.0
        %462 = vmatpush1.msra.mxu0 0.0
        %463 = vmatprep.subr.mxu0 0.0
        %464 = vmatpush1.msra.mxu0 0.0
        %465 = vmatprep.subr.mxu0 0.0
        %466 = vmatpush1.msra.mxu0 0.0
        %467 = vmatprep.subr.mxu0 0.0
        %468 = vmatpush1.msra.mxu0 0.0
        %469 = vmatprep.subr.mxu0 0.0
        %470 = vmatpush1.msra.mxu0 0.0
        %471 = vmatprep.subr.mxu0 0.0
        %472 = vmatpush1.msra.mxu0 0.0
        %473 = vmatprep.subr.mxu0 0.0
        %474 = vmatpush1.msra.mxu0 0.0
        %475 = vmatprep.subr.mxu0 0.0
        %476 = vmatpush1.msra.mxu0 0.0
        %477 = vmatprep.subr.mxu0 0.0
        %478 = vmatpush1.msra.mxu0 0.0
        %479 = vmatprep.subr.mxu0 0.0
        %480 = vmatpush1.msra.mxu0 0.0
        %481 = vmatprep.subr.mxu0 0.0
        %482 = vmatpush1.msra.mxu0 0.0
        %483 = vmatprep.subr.mxu0 0.0
        %484 = vmatpush1.msra.mxu0 0.0
        %485 = vmatprep.subr.mxu0 0.0
        %486 = vmatpush1.msra.mxu0 0.0
        %487 = vmatprep.subr.mxu0 0.0
        %488 = vmatpush1.msra.mxu0 0.0
        %489 = vmatprep.subr.mxu0 0.0
        %490 = vmatpush1.msra.mxu0 0.0
        %491 = vmatprep.subr.mxu0 0.0
        %492 = vmatpush1.msra.mxu0 0.0
        %493 = vmatprep.subr.mxu0 0.0
        %494 = vmatpush1.msra.mxu0 0.0
        %495 = vmatprep.subr.mxu0 0.0
        %496 = vmatpush1.msra.mxu0 0.0
        %497 = vmatprep.subr.mxu0 0.0
        %498 = vmatpush1.msra.mxu0 0.0
        %499 = vmatprep.subr.mxu0 0.0
        %500 = vmatpush1.msra.mxu0 0.0
        %501 = vmatprep.subr.mxu0 0.0
        %502 = vmatpush1.msra.mxu0 0.0
        %503 = vmatprep.subr.mxu0 0.0
        %504 = vmatpush1.msra.mxu0 0.0
        %505 = vmatprep.subr.mxu0 0.0
        %506 = vmatpush1.msra.mxu0 0.0
        %507 = vmatprep.subr.mxu0 0.0
        %508 = vmatpush1.msra.mxu0 0.0
        %509 = vmatprep.subr.mxu0 0.0
        %510 = vmatpush1.msra.mxu0 0.0
        %511 = vmatprep.subr.mxu0 0.0
        %512 = vmatpush1.msra.mxu0 0.0
        %513 = vmatprep.subr.mxu0 0.0
        %514 = vmatpush1.msra.mxu0 0.0
        %515 = vmatprep.subr.mxu0 0.0
        %516 = vmatpush1.msra.mxu0 0.0
        %517 = vmatprep.subr.mxu0 0.0
        %518 = vmatpush1.msra.mxu0 0.0
        %519 = vmatprep.subr.mxu0 0.0
        %520 = vmatpush1.msra.mxu0 0.0
        %521 = vmatprep.subr.mxu0 0.0
        %522 = vmatpush1.msra.mxu0 0.0
        %523 = vmatprep.mubr.f32.mxu0 0.0
        %524 = vmatmul.mubr.f32.gmra.mrb[0].mxu0 %v218
        %v525 = vpop.f32.mrb[0].mxu0
        %v526 = vadd.f32 0.0, %v525
        %v527 = vpop.f32.mrb[0].mxu0
        %528 = vdwg.mxu0
        %v529 = vlaneseq
        %v530 = vshrl.u32 %v529, 7
        %v531 = vsub.s32 0, %v530
        %v532 = vrot.slane %v526, %v531
        %v533 = vsub.f32 %v456, %v532
        %v534 = vmul.f32 %v533, %v533
        %535 = vmatprep.subr.mxu0 0.0
        %536 = vmatpush1.msra.mxu0 %v534
        %537 = vmatprep.subr.mxu0 0.0
        %538 = vmatpush1.msra.mxu0 0.0
        %539 = vmatprep.subr.mxu0 0.0
        %540 = vmatpush1.msra.mxu0 0.0
        %541 = vmatprep.subr.mxu0 0.0
        %542 = vmatpush1.msra.mxu0 0.0
        %543 = vmatprep.subr.mxu0 0.0
        %544 = vmatpush1.msra.mxu0 0.0
        %545 = vmatprep.subr.mxu0 0.0
        %546 = vmatpush1.msra.mxu0 0.0
        %547 = vmatprep.subr.mxu0 0.0
        %548 = vmatpush1.msra.mxu0 0.0
        %549 = vmatprep.subr.mxu0 0.0
        %550 = vmatpush1.msra.mxu0 0.0
        %551 = vmatprep.subr.mxu0 0.0
        %552 = vmatpush1.msra.mxu0 0.0
        %553 = vmatprep.subr.mxu0 0.0
        %554 = vmatpush1.msra.mxu0 0.0
        %555 = vmatprep.subr.mxu0 0.0
        %556 = vmatpush1.msra.mxu0 0.0
        %557 = vmatprep.subr.mxu0 0.0
        %558 = vmatpush1.msra.mxu0 0.0
        %559 = vmatprep.subr.mxu0 0.0
        %560 = vmatpush1.msra.mxu0 0.0
        %561 = vmatprep.subr.mxu0 0.0
        %562 = vmatpush1.msra.mxu0 0.0
        %563 = vmatprep.subr.mxu0 0.0
        %564 = vmatpush1.msra.mxu0 0.0
        %565 = vmatprep.subr.mxu0 0.0
        %566 = vmatpush1.msra.mxu0 0.0
        %567 = vmatprep.subr.mxu0 0.0
        %568 = vmatpush1.msra.mxu0 0.0
        %569 = vmatprep.subr.mxu0 0.0
        %570 = vmatpush1.msra.mxu0 0.0
        %571 = vmatprep.subr.mxu0 0.0
        %572 = vmatpush1.msra.mxu0 0.0
        %573 = vmatprep.subr.mxu0 0.0
        %574 = vmatpush1.msra.mxu0 0.0
        %575 = vmatprep.subr.mxu0 0.0
        %576 = vmatpush1.msra.mxu0 0.0
        %577 = vmatprep.subr.mxu0 0.0
        %578 = vmatpush1.msra.mxu0 0.0
        %579 = vmatprep.subr.mxu0 0.0
        %580 = vmatpush1.msra.mxu0 0.0
        %581 = vmatprep.subr.mxu0 0.0
        %582 = vmatpush1.msra.mxu0 0.0
        %583 = vmatprep.subr.mxu0 0.0
        %584 = vmatpush1.msra.mxu0 0.0
        %585 = vmatprep.subr.mxu0 0.0
        %586 = vmatpush1.msra.mxu0 0.0
        %587 = vmatprep.subr.mxu0 0.0
        %588 = vmatpush1.msra.mxu0 0.0
        %589 = vmatprep.subr.mxu0 0.0
        %590 = vmatpush1.msra.mxu0 0.0
        %591 = vmatprep.subr.mxu0 0.0
        %592 = vmatpush1.msra.mxu0 0.0
        %593 = vmatprep.subr.mxu0 0.0
        %594 = vmatpush1.msra.mxu0 0.0
        %595 = vmatprep.subr.mxu0 0.0
        %596 = vmatpush1.msra.mxu0 0.0
        %597 = vmatprep.subr.mxu0 0.0
        %598 = vmatpush1.msra.mxu0 0.0
        %599 = vmatprep.mubr.f32.mxu0 0.0
        %600 = vmatmul.mubr.f32.gmra.mrb[0].mxu0 %v218
        %v601 = vpop.f32.mrb[0].mxu0
        %v602 = vadd.f32 1e-05, %v601
        %v603 = vpop.f32.mrb[0].mxu0
        %604 = vdwg.mxu0
        %v605 = vrsqrt.pop %v602
        %v606 = vlaneseq
        %v607 = vshrl.u32 %v606, 7
        %v608 = vsub.s32 0, %v607
        %v609 = vrot.slane %v605, %v608
        %v610 = vmul.f32 %v533, %v609
        %v611 = vlaneseq
        %v612 = vshrl.u32 %v611, 7
        %v613 = vsub.s32 0, %v612
        %v614 = vrot.slane %v388, %v613
        %v615 = vmul.f32 %v610, %v614
        %v616 = vlaneseq
        %v617 = vshrl.u32 %v616, 7
        %v618 = vsub.s32 1, %v617
        %v619 = vrot.slane %v388, %v618
        %v620 = vadd.f32 %v615, %v619
        %v621 = vmax.f32 %v620, 0.0
        %s622 = scalar_lea.vmem [#allocation5], 128
        %v623 = vld [vmem:[%s622] sm:$0xff]
        %v624 = vld [vmem:[%s622 + $0x8] sm:$0xff]
        %v625 = vld [vmem:[%s622 + $0x10] sm:$0xff]
        %v626 = vld [vmem:[%s622 + $0x18] sm:$0xff]
        %v627 = vld [vmem:[%s622 + $0x20] sm:$0xff]
        %v628 = vld [vmem:[%s622 + $0x28] sm:$0xff]
        %v629 = vld [vmem:[%s622 + $0x30] sm:$0xff]
        %v630 = vld [vmem:[%s622 + $0x38] sm:$0xff]
        %v631 = vld [vmem:[%s622 + $0x40] sm:$0xff]
        %v632 = vld [vmem:[%s622 + $0x48] sm:$0xff]
        %v633 = vld [vmem:[%s622 + $0x50] sm:$0xff]
        %v634 = vld [vmem:[%s622 + $0x58] sm:$0xff]
        %v635 = vld [vmem:[%s622 + $0x60] sm:$0xff]
        %v636 = vld [vmem:[%s622 + $0x68] sm:$0xff]
        %v637 = vld [vmem:[%s622 + $0x70] sm:$0xff]
        %v638 = vld [vmem:[%s622 + $0x78] sm:$0xff]
        %s639 = scalar_lea.vmem [#allocation7], 2
        %v640 = vld [vmem:[%s639] sm:$0x3]
        %641 = vmatprep.subr.mxu0 0.0
        %642 = vmatpush1.msra.mxu0 %v623
        %643 = vmatprep.subr.mxu0 0.0
        %644 = vmatpush1.msra.mxu0 %v624
        %645 = vmatprep.subr.mxu0 0.0
        %646 = vmatpush1.msra.mxu0 %v625
        %647 = vmatprep.subr.mxu0 0.0
        %648 = vmatpush1.msra.mxu0 %v626
        %649 = vmatprep.subr.mxu0 0.0
        %650 = vmatpush1.msra.mxu0 %v627
        %651 = vmatprep.subr.mxu0 0.0
        %652 = vmatpush1.msra.mxu0 %v628
        %653 = vmatprep.subr.mxu0 0.0
        %654 = vmatpush1.msra.mxu0 %v629
        %655 = vmatprep.subr.mxu0 0.0
        %656 = vmatpush1.msra.mxu0 %v630
        %657 = vmatprep.subr.mxu0 0.0
        %658 = vmatpush1.msra.mxu0 %v631
        %659 = vmatprep.subr.mxu0 0.0
        %660 = vmatpush1.msra.mxu0 %v632
        %661 = vmatprep.subr.mxu0 0.0
        %662 = vmatpush1.msra.mxu0 %v633
        %663 = vmatprep.subr.mxu0 0.0
        %664 = vmatpush1.msra.mxu0 %v634
        %665 = vmatprep.subr.mxu0 0.0
        %666 = vmatpush1.msra.mxu0 %v635
        %667 = vmatprep.subr.mxu0 0.0
        %668 = vmatpush1.msra.mxu0 %v636
        %669 = vmatprep.subr.mxu0 0.0
        %670 = vmatpush1.msra.mxu0 %v637
        %671 = vmatprep.subr.mxu0 0.0
        %672 = vmatpush1.msra.mxu0 %v638
        %673 = vmatprep.subr.mxu0 0.0
        %674 = vmatpush1.msra.mxu0 0.0
        %675 = vmatprep.subr.mxu0 0.0
        %676 = vmatpush1.msra.mxu0 0.0
        %677 = vmatprep.subr.mxu0 0.0
        %678 = vmatpush1.msra.mxu0 0.0
        %679 = vmatprep.subr.mxu0 0.0
        %680 = vmatpush1.msra.mxu0 0.0
        %681 = vmatprep.subr.mxu0 0.0
        %682 = vmatpush1.msra.mxu0 0.0
        %683 = vmatprep.subr.mxu0 0.0
        %684 = vmatpush1.msra.mxu0 0.0
        %685 = vmatprep.subr.mxu0 0.0
        %686 = vmatpush1.msra.mxu0 0.0
        %687 = vmatprep.subr.mxu0 0.0
        %688 = vmatpush1.msra.mxu0 0.0
        %689 = vmatprep.subr.mxu0 0.0
        %690 = vmatpush1.msra.mxu0 0.0
        %691 = vmatprep.subr.mxu0 0.0
        %692 = vmatpush1.msra.mxu0 0.0
        %693 = vmatprep.subr.mxu0 0.0
        %694 = vmatpush1.msra.mxu0 0.0
        %695 = vmatprep.subr.mxu0 0.0
        %696 = vmatpush1.msra.mxu0 0.0
        %697 = vmatprep.subr.mxu0 0.0
        %698 = vmatpush1.msra.mxu0 0.0
        %699 = vmatprep.subr.mxu0 0.0
        %700 = vmatpush1.msra.mxu0 0.0
        %701 = vmatprep.subr.mxu0 0.0
        %702 = vmatpush1.msra.mxu0 0.0
        %703 = vmatprep.subr.mxu0 0.0
        %704 = vmatpush1.msra.mxu0 0.0
        %705 = vmatprep.mubr.f32.mxu0 0.0
        %706 = vmatmul.mubr.f32.gmra.mrb[0].mxu0 %v621
        %v707 = vpop.f32.mrb[0].mxu0
        %v708 = vadd.f32 0.0, %v707
        %v709 = vpop.f32.mrb[0].mxu0
        %710 = vdwg.mxu0
        %711 = vmatprep.subr.mxu0 0.0
        %712 = vmatpush1.msra.mxu0 %v708
        %713 = vmatprep.subr.mxu0 0.0
        %714 = vmatpush1.msra.mxu0 0.0
        %715 = vmatprep.subr.mxu0 0.0
        %716 = vmatpush1.msra.mxu0 0.0
        %717 = vmatprep.subr.mxu0 0.0
        %718 = vmatpush1.msra.mxu0 0.0
        %719 = vmatprep.subr.mxu0 0.0
        %720 = vmatpush1.msra.mxu0 0.0
        %721 = vmatprep.subr.mxu0 0.0
        %722 = vmatpush1.msra.mxu0 0.0
        %723 = vmatprep.subr.mxu0 0.0
        %724 = vmatpush1.msra.mxu0 0.0
        %725 = vmatprep.subr.mxu0 0.0
        %726 = vmatpush1.msra.mxu0 0.0
        %727 = vmatprep.subr.mxu0 0.0
        %728 = vmatpush1.msra.mxu0 0.0
        %729 = vmatprep.subr.mxu0 0.0
        %730 = vmatpush1.msra.mxu0 0.0
        %731 = vmatprep.subr.mxu0 0.0
        %732 = vmatpush1.msra.mxu0 0.0
        %733 = vmatprep.subr.mxu0 0.0
        %734 = vmatpush1.msra.mxu0 0.0
        %735 = vmatprep.subr.mxu0 0.0
        %736 = vmatpush1.msra.mxu0 0.0
        %737 = vmatprep.subr.mxu0 0.0
        %738 = vmatpush1.msra.mxu0 0.0
        %739 = vmatprep.subr.mxu0 0.0
        %740 = vmatpush1.msra.mxu0 0.0
        %741 = vmatprep.subr.mxu0 0.0
        %742 = vmatpush1.msra.mxu0 0.0
        %743 = vmatprep.subr.mxu0 0.0
        %744 = vmatpush1.msra.mxu0 0.0
        %745 = vmatprep.subr.mxu0 0.0
        %746 = vmatpush1.msra.mxu0 0.0
        %747 = vmatprep.subr.mxu0 0.0
        %748 = vmatpush1.msra.mxu0 0.0
        %749 = vmatprep.subr.mxu0 0.0
        %750 = vmatpush1.msra.mxu0 0.0
        %751 = vmatprep.subr.mxu0 0.0
        %752 = vmatpush1.msra.mxu0 0.0
        %753 = vmatprep.subr.mxu0 0.0
        %754 = vmatpush1.msra.mxu0 0.0
        %755 = vmatprep.subr.mxu0 0.0
        %756 = vmatpush1.msra.mxu0 0.0
        %757 = vmatprep.subr.mxu0 0.0
        %758 = vmatpush1.msra.mxu0 0.0
        %759 = vmatprep.subr.mxu0 0.0
        %760 = vmatpush1.msra.mxu0 0.0
        %761 = vmatprep.subr.mxu0 0.0
        %762 = vmatpush1.msra.mxu0 0.0
        %763 = vmatprep.subr.mxu0 0.0
        %764 = vmatpush1.msra.mxu0 0.0
        %765 = vmatprep.subr.mxu0 0.0
        %766 = vmatpush1.msra.mxu0 0.0
        %767 = vmatprep.subr.mxu0 0.0
        %768 = vmatpush1.msra.mxu0 0.0
        %769 = vmatprep.subr.mxu0 0.0
        %770 = vmatpush1.msra.mxu0 0.0
        %771 = vmatprep.subr.mxu0 0.0
        %772 = vmatpush1.msra.mxu0 0.0
        %773 = vmatprep.subr.mxu0 0.0
        %774 = vmatpush1.msra.mxu0 0.0
        %775 = vmatprep.mubr.f32.mxu0 0.0
        %776 = vmatmul.mubr.f32.gmra.mrb[0].mxu0 %v218
        %v777 = vpop.f32.mrb[0].mxu0
        %v778 = vadd.f32 0.0, %v777
        %v779 = vpop.f32.mrb[0].mxu0
        %780 = vdwg.mxu0
        %v781 = vlaneseq
        %v782 = vshrl.u32 %v781, 7
        %v783 = vsub.s32 0, %v782
        %v784 = vrot.slane %v778, %v783
        %v785 = vsub.f32 %v708, %v784
        %v786 = vmul.f32 %v785, %v785
        %787 = vmatprep.subr.mxu0 0.0
        %788 = vmatpush1.msra.mxu0 %v786
        %789 = vmatprep.subr.mxu0 0.0
        %790 = vmatpush1.msra.mxu0 0.0
        %791 = vmatprep.subr.mxu0 0.0
        %792 = vmatpush1.msra.mxu0 0.0
        %793 = vmatprep.subr.mxu0 0.0
        %794 = vmatpush1.msra.mxu0 0.0
        %795 = vmatprep.subr.mxu0 0.0
        %796 = vmatpush1.msra.mxu0 0.0
        %797 = vmatprep.subr.mxu0 0.0
        %798 = vmatpush1.msra.mxu0 0.0
        %799 = vmatprep.subr.mxu0 0.0
        %800 = vmatpush1.msra.mxu0 0.0
        %801 = vmatprep.subr.mxu0 0.0
        %802 = vmatpush1.msra.mxu0 0.0
        %803 = vmatprep.subr.mxu0 0.0
        %804 = vmatpush1.msra.mxu0 0.0
        %805 = vmatprep.subr.mxu0 0.0
        %806 = vmatpush1.msra.mxu0 0.0
        %807 = vmatprep.subr.mxu0 0.0
        %808 = vmatpush1.msra.mxu0 0.0
        %809 = vmatprep.subr.mxu0 0.0
        %810 = vmatpush1.msra.mxu0 0.0
        %811 = vmatprep.subr.mxu0 0.0
        %812 = vmatpush1.msra.mxu0 0.0
        %813 = vmatprep.subr.mxu0 0.0
        %814 = vmatpush1.msra.mxu0 0.0
        %815 = vmatprep.subr.mxu0 0.0
        %816 = vmatpush1.msra.mxu0 0.0
        %817 = vmatprep.subr.mxu0 0.0
        %818 = vmatpush1.msra.mxu0 0.0
        %819 = vmatprep.subr.mxu0 0.0
        %820 = vmatpush1.msra.mxu0 0.0
        %821 = vmatprep.subr.mxu0 0.0
        %822 = vmatpush1.msra.mxu0 0.0
        %823 = vmatprep.subr.mxu0 0.0
        %824 = vmatpush1.msra.mxu0 0.0
        %825 = vmatprep.subr.mxu0 0.0
        %826 = vmatpush1.msra.mxu0 0.0
        %827 = vmatprep.subr.mxu0 0.0
        %828 = vmatpush1.msra.mxu0 0.0
        %829 = vmatprep.subr.mxu0 0.0
        %830 = vmatpush1.msra.mxu0 0.0
        %831 = vmatprep.subr.mxu0 0.0
        %832 = vmatpush1.msra.mxu0 0.0
        %833 = vmatprep.subr.mxu0 0.0
        %834 = vmatpush1.msra.mxu0 0.0
        %835 = vmatprep.subr.mxu0 0.0
        %836 = vmatpush1.msra.mxu0 0.0
        %837 = vmatprep.subr.mxu0 0.0
        %838 = vmatpush1.msra.mxu0 0.0
        %839 = vmatprep.subr.mxu0 0.0
        %840 = vmatpush1.msra.mxu0 0.0
        %841 = vmatprep.subr.mxu0 0.0
        %842 = vmatpush1.msra.mxu0 0.0
        %843 = vmatprep.subr.mxu0 0.0
        %844 = vmatpush1.msra.mxu0 0.0
        %845 = vmatprep.subr.mxu0 0.0
        %846 = vmatpush1.msra.mxu0 0.0
        %847 = vmatprep.subr.mxu0 0.0
        %848 = vmatpush1.msra.mxu0 0.0
        %849 = vmatprep.subr.mxu0 0.0
        %850 = vmatpush1.msra.mxu0 0.0
        %851 = vmatprep.mubr.f32.mxu0 0.0
        %852 = vmatmul.mubr.f32.gmra.mrb[0].mxu0 %v218
        %v853 = vpop.f32.mrb[0].mxu0
        %v854 = vadd.f32 1e-05, %v853
        %v855 = vpop.f32.mrb[0].mxu0
        %856 = vdwg.mxu0
        %v857 = vrsqrt.pop %v854
        %v858 = vlaneseq
        %v859 = vshrl.u32 %v858, 7
        %v860 = vsub.s32 0, %v859
        %v861 = vrot.slane %v857, %v860
        %v862 = vmul.f32 %v785, %v861
        %v863 = vlaneseq
        %v864 = vshrl.u32 %v863, 7
        %v865 = vsub.s32 0, %v864
        %v866 = vrot.slane %v640, %v865
        %v867 = vmul.f32 %v862, %v866
        %v868 = vlaneseq
        %v869 = vshrl.u32 %v868, 7
        %v870 = vsub.s32 1, %v869
        %v871 = vrot.slane %v640, %v870
        %v872 = vadd.f32 %v867, %v871
        %v873 = vmax.f32 %v872, 0.0
        %s874 = scalar_lea.vmem [#allocation5], 256
        %v875 = vld [vmem:[%s874] sm:$0xff]
        %v876 = vld [vmem:[%s874 + $0x8] sm:$0xff]
        %v877 = vld [vmem:[%s874 + $0x10] sm:$0xff]
        %v878 = vld [vmem:[%s874 + $0x18] sm:$0xff]
        %v879 = vld [vmem:[%s874 + $0x20] sm:$0xff]
        %v880 = vld [vmem:[%s874 + $0x28] sm:$0xff]
        %v881 = vld [vmem:[%s874 + $0x30] sm:$0xff]
        %v882 = vld [vmem:[%s874 + $0x38] sm:$0xff]
        %v883 = vld [vmem:[%s874 + $0x40] sm:$0xff]
        %v884 = vld [vmem:[%s874 + $0x48] sm:$0xff]
        %v885 = vld [vmem:[%s874 + $0x50] sm:$0xff]
        %v886 = vld [vmem:[%s874 + $0x58] sm:$0xff]
        %v887 = vld [vmem:[%s874 + $0x60] sm:$0xff]
        %v888 = vld [vmem:[%s874 + $0x68] sm:$0xff]
        %v889 = vld [vmem:[%s874 + $0x70] sm:$0xff]
        %v890 = vld [vmem:[%s874 + $0x78] sm:$0xff]
        %s891 = scalar_lea.vmem [#allocation7], 4
        %v892 = vld [vmem:[%s891] sm:$0x3]
        %893 = vmatprep.subr.mxu0 0.0
        %894 = vmatpush1.msra.mxu0 %v875
        %895 = vmatprep.subr.mxu0 0.0
        %896 = vmatpush1.msra.mxu0 %v876
        %897 = vmatprep.subr.mxu0 0.0
        %898 = vmatpush1.msra.mxu0 %v877
        %899 = vmatprep.subr.mxu0 0.0
        %900 = vmatpush1.msra.mxu0 %v878
        %901 = vmatprep.subr.mxu0 0.0
        %902 = vmatpush1.msra.mxu0 %v879
        %903 = vmatprep.subr.mxu0 0.0
        %904 = vmatpush1.msra.mxu0 %v880
        %905 = vmatprep.subr.mxu0 0.0
        %906 = vmatpush1.msra.mxu0 %v881
        %907 = vmatprep.subr.mxu0 0.0
        %908 = vmatpush1.msra.mxu0 %v882
        %909 = vmatprep.subr.mxu0 0.0
        %910 = vmatpush1.msra.mxu0 %v883
        %911 = vmatprep.subr.mxu0 0.0
        %912 = vmatpush1.msra.mxu0 %v884
        %913 = vmatprep.subr.mxu0 0.0
        %914 = vmatpush1.msra.mxu0 %v885
        %915 = vmatprep.subr.mxu0 0.0
        %916 = vmatpush1.msra.mxu0 %v886
        %917 = vmatprep.subr.mxu0 0.0
        %918 = vmatpush1.msra.mxu0 %v887
        %919 = vmatprep.subr.mxu0 0.0
        %920 = vmatpush1.msra.mxu0 %v888
        %921 = vmatprep.subr.mxu0 0.0
        %922 = vmatpush1.msra.mxu0 %v889
        %923 = vmatprep.subr.mxu0 0.0
        %924 = vmatpush1.msra.mxu0 %v890
        %925 = vmatprep.subr.mxu0 0.0
        %926 = vmatpush1.msra.mxu0 0.0
        %927 = vmatprep.subr.mxu0 0.0
        %928 = vmatpush1.msra.mxu0 0.0
        %929 = vmatprep.subr.mxu0 0.0
        %930 = vmatpush1.msra.mxu0 0.0
        %931 = vmatprep.subr.mxu0 0.0
        %932 = vmatpush1.msra.mxu0 0.0
        %933 = vmatprep.subr.mxu0 0.0
        %934 = vmatpush1.msra.mxu0 0.0
        %935 = vmatprep.subr.mxu0 0.0
        %936 = vmatpush1.msra.mxu0 0.0
        %937 = vmatprep.subr.mxu0 0.0
        %938 = vmatpush1.msra.mxu0 0.0
        %939 = vmatprep.subr.mxu0 0.0
        %940 = vmatpush1.msra.mxu0 0.0
        %941 = vmatprep.subr.mxu0 0.0
        %942 = vmatpush1.msra.mxu0 0.0
        %943 = vmatprep.subr.mxu0 0.0
        %944 = vmatpush1.msra.mxu0 0.0
        %945 = vmatprep.subr.mxu0 0.0
        %946 = vmatpush1.msra.mxu0 0.0
        %947 = vmatprep.subr.mxu0 0.0
        %948 = vmatpush1.msra.mxu0 0.0
        %949 = vmatprep.subr.mxu0 0.0
        %950 = vmatpush1.msra.mxu0 0.0
        %951 = vmatprep.subr.mxu0 0.0
        %952 = vmatpush1.msra.mxu0 0.0
        %953 = vmatprep.subr.mxu0 0.0
        %954 = vmatpush1.msra.mxu0 0.0
        %955 = vmatprep.subr.mxu0 0.0
        %956 = vmatpush1.msra.mxu0 0.0
        %957 = vmatprep.mubr.f32.mxu0 0.0
        %958 = vmatmul.mubr.f32.gmra.mrb[0].mxu0 %v873
        %v959 = vpop.f32.mrb[0].mxu0
        %v960 = vadd.f32 0.0, %v959
        %v961 = vpop.f32.mrb[0].mxu0
        %962 = vdwg.mxu0
        %963 = vmatprep.subr.mxu0 0.0
        %964 = vmatpush1.msra.mxu0 %v960
        %965 = vmatprep.subr.mxu0 0.0
        %966 = vmatpush1.msra.mxu0 0.0
        %967 = vmatprep.subr.mxu0 0.0
        %968 = vmatpush1.msra.mxu0 0.0
        %969 = vmatprep.subr.mxu0 0.0
        %970 = vmatpush1.msra.mxu0 0.0
        %971 = vmatprep.subr.mxu0 0.0
        %972 = vmatpush1.msra.mxu0 0.0
        %973 = vmatprep.subr.mxu0 0.0
        %974 = vmatpush1.msra.mxu0 0.0
        %975 = vmatprep.subr.mxu0 0.0
        %976 = vmatpush1.msra.mxu0 0.0
        %977 = vmatprep.subr.mxu0 0.0
        %978 = vmatpush1.msra.mxu0 0.0
        %979 = vmatprep.subr.mxu0 0.0
        %980 = vmatpush1.msra.mxu0 0.0
        %981 = vmatprep.subr.mxu0 0.0
        %982 = vmatpush1.msra.mxu0 0.0
        %983 = vmatprep.subr.mxu0 0.0
        %984 = vmatpush1.msra.mxu0 0.0
        %985 = vmatprep.subr.mxu0 0.0
        %986 = vmatpush1.msra.mxu0 0.0
        %987 = vmatprep.subr.mxu0 0.0
        %988 = vmatpush1.msra.mxu0 0.0
        %989 = vmatprep.subr.mxu0 0.0
        %990 = vmatpush1.msra.mxu0 0.0
        %991 = vmatprep.subr.mxu0 0.0
        %992 = vmatpush1.msra.mxu0 0.0
        %993 = vmatprep.subr.mxu0 0.0
        %994 = vmatpush1.msra.mxu0 0.0
        %995 = vmatprep.subr.mxu0 0.0
        %996 = vmatpush1.msra.mxu0 0.0
        %997 = vmatprep.subr.mxu0 0.0
        %998 = vmatpush1.msra.mxu0 0.0
        %999 = vmatprep.subr.mxu0 0.0
        %1000 = vmatpush1.msra.mxu0 0.0
        %1001 = vmatprep.subr.mxu0 0.0
        %1002 = vmatpush1.msra.mxu0 0.0
        %1003 = vmatprep.subr.mxu0 0.0
        %1004 = vmatpush1.msra.mxu0 0.0
        %1005 = vmatprep.subr.mxu0 0.0
        %1006 = vmatpush1.msra.mxu0 0.0
        %1007 = vmatprep.subr.mxu0 0.0
        %1008 = vmatpush1.msra.mxu0 0.0
        %1009 = vmatprep.subr.mxu0 0.0
        %1010 = vmatpush1.msra.mxu0 0.0
        %1011 = vmatprep.subr.mxu0 0.0
        %1012 = vmatpush1.msra.mxu0 0.0
        %1013 = vmatprep.subr.mxu0 0.0
        %1014 = vmatpush1.msra.mxu0 0.0
        %1015 = vmatprep.subr.mxu0 0.0
        %1016 = vmatpush1.msra.mxu0 0.0
        %1017 = vmatprep.subr.mxu0 0.0
        %1018 = vmatpush1.msra.mxu0 0.0
        %1019 = vmatprep.subr.mxu0 0.0
        %1020 = vmatpush1.msra.mxu0 0.0
        %1021 = vmatprep.subr.mxu0 0.0
        %1022 = vmatpush1.msra.mxu0 0.0
        %1023 = vmatprep.subr.mxu0 0.0
        %1024 = vmatpush1.msra.mxu0 0.0
        %1025 = vmatprep.subr.mxu0 0.0
        %1026 = vmatpush1.msra.mxu0 0.0
        %1027 = vmatprep.mubr.f32.mxu0 0.0
        %1028 = vmatmul.mubr.f32.gmra.mrb[0].mxu0 %v218
        %v1029 = vpop.f32.mrb[0].mxu0
        %v1030 = vadd.f32 0.0, %v1029
        %v1031 = vpop.f32.mrb[0].mxu0
        %1032 = vdwg.mxu0
        %v1033 = vlaneseq
        %v1034 = vshrl.u32 %v1033, 7
        %v1035 = vsub.s32 0, %v1034
        %v1036 = vrot.slane %v1030, %v1035
        %v1037 = vsub.f32 %v960, %v1036
        %v1038 = vmul.f32 %v1037, %v1037
        %1039 = vmatprep.subr.mxu0 0.0
        %1040 = vmatpush1.msra.mxu0 %v1038
        %1041 = vmatprep.subr.mxu0 0.0
        %1042 = vmatpush1.msra.mxu0 0.0
        %1043 = vmatprep.subr.mxu0 0.0
        %1044 = vmatpush1.msra.mxu0 0.0
        %1045 = vmatprep.subr.mxu0 0.0
        %1046 = vmatpush1.msra.mxu0 0.0
        %1047 = vmatprep.subr.mxu0 0.0
        %1048 = vmatpush1.msra.mxu0 0.0
        %1049 = vmatprep.subr.mxu0 0.0
        %1050 = vmatpush1.msra.mxu0 0.0
        %1051 = vmatprep.subr.mxu0 0.0
        %1052 = vmatpush1.msra.mxu0 0.0
        %1053 = vmatprep.subr.mxu0 0.0
        %1054 = vmatpush1.msra.mxu0 0.0
        %1055 = vmatprep.subr.mxu0 0.0
        %1056 = vmatpush1.msra.mxu0 0.0
        %1057 = vmatprep.subr.mxu0 0.0
        %1058 = vmatpush1.msra.mxu0 0.0
        %1059 = vmatprep.subr.mxu0 0.0
        %1060 = vmatpush1.msra.mxu0 0.0
        %1061 = vmatprep.subr.mxu0 0.0
        %1062 = vmatpush1.msra.mxu0 0.0
        %1063 = vmatprep.subr.mxu0 0.0
        %1064 = vmatpush1.msra.mxu0 0.0
        %1065 = vmatprep.subr.mxu0 0.0
        %1066 = vmatpush1.msra.mxu0 0.0
        %1067 = vmatprep.subr.mxu0 0.0
        %1068 = vmatpush1.msra.mxu0 0.0
        %1069 = vmatprep.subr.mxu0 0.0
        %1070 = vmatpush1.msra.mxu0 0.0
        %1071 = vmatprep.subr.mxu0 0.0
        %1072 = vmatpush1.msra.mxu0 0.0
        %1073 = vmatprep.subr.mxu0 0.0
        %1074 = vmatpush1.msra.mxu0 0.0
        %1075 = vmatprep.subr.mxu0 0.0
        %1076 = vmatpush1.msra.mxu0 0.0
        %1077 = vmatprep.subr.mxu0 0.0
        %1078 = vmatpush1.msra.mxu0 0.0
        %1079 = vmatprep.subr.mxu0 0.0
        %1080 = vmatpush1.msra.mxu0 0.0
        %1081 = vmatprep.subr.mxu0 0.0
        %1082 = vmatpush1.msra.mxu0 0.0
        %1083 = vmatprep.subr.mxu0 0.0
        %1084 = vmatpush1.msra.mxu0 0.0
        %1085 = vmatprep.subr.mxu0 0.0
        %1086 = vmatpush1.msra.mxu0 0.0
        %1087 = vmatprep.subr.mxu0 0.0
        %1088 = vmatpush1.msra.mxu0 0.0
        %1089 = vmatprep.subr.mxu0 0.0
        %1090 = vmatpush1.msra.mxu0 0.0
        %1091 = vmatprep.subr.mxu0 0.0
        %1092 = vmatpush1.msra.mxu0 0.0
        %1093 = vmatprep.subr.mxu0 0.0
        %1094 = vmatpush1.msra.mxu0 0.0
        %1095 = vmatprep.subr.mxu0 0.0
        %1096 = vmatpush1.msra.mxu0 0.0
        %1097 = vmatprep.subr.mxu0 0.0
        %1098 = vmatpush1.msra.mxu0 0.0
        %1099 = vmatprep.subr.mxu0 0.0
        %1100 = vmatpush1.msra.mxu0 0.0
        %1101 = vmatprep.subr.mxu0 0.0
        %1102 = vmatpush1.msra.mxu0 0.0
        %1103 = vmatprep.mubr.f32.mxu0 0.0
        %1104 = vmatmul.mubr.f32.gmra.mrb[0].mxu0 %v218
        %v1105 = vpop.f32.mrb[0].mxu0
        %v1106 = vadd.f32 1e-05, %v1105
        %v1107 = vpop.f32.mrb[0].mxu0
        %1108 = vdwg.mxu0
        %v1109 = vrsqrt.pop %v1106
        %v1110 = vlaneseq
        %v1111 = vshrl.u32 %v1110, 7
        %v1112 = vsub.s32 0, %v1111
        %v1113 = vrot.slane %v1109, %v1112
        %v1114 = vmul.f32 %v1037, %v1113
        %v1115 = vlaneseq
        %v1116 = vshrl.u32 %v1115, 7
        %v1117 = vsub.s32 0, %v1116
        %v1118 = vrot.slane %v892, %v1117
        %v1119 = vmul.f32 %v1114, %v1118
        %v1120 = vlaneseq
        %v1121 = vshrl.u32 %v1120, 7
        %v1122 = vsub.s32 1, %v1121
        %v1123 = vrot.slane %v892, %v1122
        %v1124 = vadd.f32 %v1119, %v1123
        %v1125 = vmax.f32 %v1124, 0.0
        %s1126 = scalar_lea.vmem [#allocation5], 384
        %v1127 = vld [vmem:[%s1126] sm:$0xff]
        %v1128 = vld [vmem:[%s1126 + $0x8] sm:$0xff]
        %v1129 = vld [vmem:[%s1126 + $0x10] sm:$0xff]
        %v1130 = vld [vmem:[%s1126 + $0x18] sm:$0xff]
        %v1131 = vld [vmem:[%s1126 + $0x20] sm:$0xff]
        %v1132 = vld [vmem:[%s1126 + $0x28] sm:$0xff]
        %v1133 = vld [vmem:[%s1126 + $0x30] sm:$0xff]
        %v1134 = vld [vmem:[%s1126 + $0x38] sm:$0xff]
        %v1135 = vld [vmem:[%s1126 + $0x40] sm:$0xff]
        %v1136 = vld [vmem:[%s1126 + $0x48] sm:$0xff]
        %v1137 = vld [vmem:[%s1126 + $0x50] sm:$0xff]
        %v1138 = vld [vmem:[%s1126 + $0x58] sm:$0xff]
        %v1139 = vld [vmem:[%s1126 + $0x60] sm:$0xff]
        %v1140 = vld [vmem:[%s1126 + $0x68] sm:$0xff]
        %v1141 = vld [vmem:[%s1126 + $0x70] sm:$0xff]
        %v1142 = vld [vmem:[%s1126 + $0x78] sm:$0xff]
        %s1143 = scalar_lea.vmem [#allocation7], 6
        %v1144 = vld [vmem:[%s1143] sm:$0x3]
        %1145 = vmatprep.subr.mxu0 0.0
        %1146 = vmatpush1.msra.mxu0 %v1127
        %1147 = vmatprep.subr.mxu0 0.0
        %1148 = vmatpush1.msra.mxu0 %v1128
        %1149 = vmatprep.subr.mxu0 0.0
        %1150 = vmatpush1.msra.mxu0 %v1129
        %1151 = vmatprep.subr.mxu0 0.0
        %1152 = vmatpush1.msra.mxu0 %v1130
        %1153 = vmatprep.subr.mxu0 0.0
        %1154 = vmatpush1.msra.mxu0 %v1131
        %1155 = vmatprep.subr.mxu0 0.0
        %1156 = vmatpush1.msra.mxu0 %v1132
        %1157 = vmatprep.subr.mxu0 0.0
        %1158 = vmatpush1.msra.mxu0 %v1133
        %1159 = vmatprep.subr.mxu0 0.0
        %1160 = vmatpush1.msra.mxu0 %v1134
        %1161 = vmatprep.subr.mxu0 0.0
        %1162 = vmatpush1.msra.mxu0 %v1135
        %1163 = vmatprep.subr.mxu0 0.0
        %1164 = vmatpush1.msra.mxu0 %v1136
        %1165 = vmatprep.subr.mxu0 0.0
        %1166 = vmatpush1.msra.mxu0 %v1137
        %1167 = vmatprep.subr.mxu0 0.0
        %1168 = vmatpush1.msra.mxu0 %v1138
        %1169 = vmatprep.subr.mxu0 0.0
        %1170 = vmatpush1.msra.mxu0 %v1139
        %1171 = vmatprep.subr.mxu0 0.0
        %1172 = vmatpush1.msra.mxu0 %v1140
        %1173 = vmatprep.subr.mxu0 0.0
        %1174 = vmatpush1.msra.mxu0 %v1141
        %1175 = vmatprep.subr.mxu0 0.0
        %1176 = vmatpush1.msra.mxu0 %v1142
        %1177 = vmatprep.subr.mxu0 0.0
        %1178 = vmatpush1.msra.mxu0 0.0
        %1179 = vmatprep.subr.mxu0 0.0
        %1180 = vmatpush1.msra.mxu0 0.0
        %1181 = vmatprep.subr.mxu0 0.0
        %1182 = vmatpush1.msra.mxu0 0.0
        %1183 = vmatprep.subr.mxu0 0.0
        %1184 = vmatpush1.msra.mxu0 0.0
        %1185 = vmatprep.subr.mxu0 0.0
        %1186 = vmatpush1.msra.mxu0 0.0
        %1187 = vmatprep.subr.mxu0 0.0
        %1188 = vmatpush1.msra.mxu0 0.0
        %1189 = vmatprep.subr.mxu0 0.0
        %1190 = vmatpush1.msra.mxu0 0.0
        %1191 = vmatprep.subr.mxu0 0.0
        %1192 = vmatpush1.msra.mxu0 0.0
        %1193 = vmatprep.subr.mxu0 0.0
        %1194 = vmatpush1.msra.mxu0 0.0
        %1195 = vmatprep.subr.mxu0 0.0
        %1196 = vmatpush1.msra.mxu0 0.0
        %1197 = vmatprep.subr.mxu0 0.0
        %1198 = vmatpush1.msra.mxu0 0.0
        %1199 = vmatprep.subr.mxu0 0.0
        %1200 = vmatpush1.msra.mxu0 0.0
        %1201 = vmatprep.subr.mxu0 0.0
        %1202 = vmatpush1.msra.mxu0 0.0
        %1203 = vmatprep.subr.mxu0 0.0
        %1204 = vmatpush1.msra.mxu0 0.0
        %1205 = vmatprep.subr.mxu0 0.0
        %1206 = vmatpush1.msra.mxu0 0.0
        %1207 = vmatprep.subr.mxu0 0.0
        %1208 = vmatpush1.msra.mxu0 0.0
        %1209 = vmatprep.mubr.f32.mxu0 0.0
        %1210 = vmatmul.mubr.f32.gmra.mrb[0].mxu0 %v1125
        %v1211 = vpop.f32.mrb[0].mxu0
        %v1212 = vadd.f32 0.0, %v1211
        %v1213 = vpop.f32.mrb[0].mxu0
        %1214 = vdwg.mxu0
        %1215 = vmatprep.subr.mxu0 0.0
        %1216 = vmatpush1.msra.mxu0 %v1212
        %1217 = vmatprep.subr.mxu0 0.0
        %1218 = vmatpush1.msra.mxu0 0.0
        %1219 = vmatprep.subr.mxu0 0.0
        %1220 = vmatpush1.msra.mxu0 0.0
        %1221 = vmatprep.subr.mxu0 0.0
        %1222 = vmatpush1.msra.mxu0 0.0
        %1223 = vmatprep.subr.mxu0 0.0
        %1224 = vmatpush1.msra.mxu0 0.0
        %1225 = vmatprep.subr.mxu0 0.0
        %1226 = vmatpush1.msra.mxu0 0.0
        %1227 = vmatprep.subr.mxu0 0.0
        %1228 = vmatpush1.msra.mxu0 0.0
        %1229 = vmatprep.subr.mxu0 0.0
        %1230 = vmatpush1.msra.mxu0 0.0
        %1231 = vmatprep.subr.mxu0 0.0
        %1232 = vmatpush1.msra.mxu0 0.0
        %1233 = vmatprep.subr.mxu0 0.0
        %1234 = vmatpush1.msra.mxu0 0.0
        %1235 = vmatprep.subr.mxu0 0.0
        %1236 = vmatpush1.msra.mxu0 0.0
        %1237 = vmatprep.subr.mxu0 0.0
        %1238 = vmatpush1.msra.mxu0 0.0
        %1239 = vmatprep.subr.mxu0 0.0
        %1240 = vmatpush1.msra.mxu0 0.0
        %1241 = vmatprep.subr.mxu0 0.0
        %1242 = vmatpush1.msra.mxu0 0.0
        %1243 = vmatprep.subr.mxu0 0.0
        %1244 = vmatpush1.msra.mxu0 0.0
        %1245 = vmatprep.subr.mxu0 0.0
        %1246 = vmatpush1.msra.mxu0 0.0
        %1247 = vmatprep.subr.mxu0 0.0
        %1248 = vmatpush1.msra.mxu0 0.0
        %1249 = vmatprep.subr.mxu0 0.0
        %1250 = vmatpush1.msra.mxu0 0.0
        %1251 = vmatprep.subr.mxu0 0.0
        %1252 = vmatpush1.msra.mxu0 0.0
        %1253 = vmatprep.subr.mxu0 0.0
        %1254 = vmatpush1.msra.mxu0 0.0
        %1255 = vmatprep.subr.mxu0 0.0
        %1256 = vmatpush1.msra.mxu0 0.0
        %1257 = vmatprep.subr.mxu0 0.0
        %1258 = vmatpush1.msra.mxu0 0.0
        %1259 = vmatprep.subr.mxu0 0.0
        %1260 = vmatpush1.msra.mxu0 0.0
        %1261 = vmatprep.subr.mxu0 0.0
        %1262 = vmatpush1.msra.mxu0 0.0
        %1263 = vmatprep.subr.mxu0 0.0
        %1264 = vmatpush1.msra.mxu0 0.0
        %1265 = vmatprep.subr.mxu0 0.0
        %1266 = vmatpush1.msra.mxu0 0.0
        %1267 = vmatprep.subr.mxu0 0.0
        %1268 = vmatpush1.msra.mxu0 0.0
        %1269 = vmatprep.subr.mxu0 0.0
        %1270 = vmatpush1.msra.mxu0 0.0
        %1271 = vmatprep.subr.mxu0 0.0
        %1272 = vmatpush1.msra.mxu0 0.0
        %1273 = vmatprep.subr.mxu0 0.0
        %1274 = vmatpush1.msra.mxu0 0.0
        %1275 = vmatprep.subr.mxu0 0.0
        %1276 = vmatpush1.msra.mxu0 0.0
        %1277 = vmatprep.subr.mxu0 0.0
        %1278 = vmatpush1.msra.mxu0 0.0
        %1279 = vmatprep.mubr.f32.mxu0 0.0
        %1280 = vmatmul.mubr.f32.gmra.mrb[0].mxu0 %v218
        %v1281 = vpop.f32.mrb[0].mxu0
        %v1282 = vadd.f32 0.0, %v1281
        %v1283 = vpop.f32.mrb[0].mxu0
        %1284 = vdwg.mxu0
        %v1285 = vlaneseq
        %v1286 = vshrl.u32 %v1285, 7
        %v1287 = vsub.s32 0, %v1286
        %v1288 = vrot.slane %v1282, %v1287
        %v1289 = vsub.f32 %v1212, %v1288
        %v1290 = vmul.f32 %v1289, %v1289
        %1291 = vmatprep.subr.mxu0 0.0
        %1292 = vmatpush1.msra.mxu0 %v1290
        %1293 = vmatprep.subr.mxu0 0.0
        %1294 = vmatpush1.msra.mxu0 0.0
        %1295 = vmatprep.subr.mxu0 0.0
        %1296 = vmatpush1.msra.mxu0 0.0
        %1297 = vmatprep.subr.mxu0 0.0
        %1298 = vmatpush1.msra.mxu0 0.0
        %1299 = vmatprep.subr.mxu0 0.0
        %1300 = vmatpush1.msra.mxu0 0.0
        %1301 = vmatprep.subr.mxu0 0.0
        %1302 = vmatpush1.msra.mxu0 0.0
        %1303 = vmatprep.subr.mxu0 0.0
        %1304 = vmatpush1.msra.mxu0 0.0
        %1305 = vmatprep.subr.mxu0 0.0
        %1306 = vmatpush1.msra.mxu0 0.0
        %1307 = vmatprep.subr.mxu0 0.0
        %1308 = vmatpush1.msra.mxu0 0.0
        %1309 = vmatprep.subr.mxu0 0.0
        %1310 = vmatpush1.msra.mxu0 0.0
        %1311 = vmatprep.subr.mxu0 0.0
        %1312 = vmatpush1.msra.mxu0 0.0
        %1313 = vmatprep.subr.mxu0 0.0
        %1314 = vmatpush1.msra.mxu0 0.0
        %1315 = vmatprep.subr.mxu0 0.0
        %1316 = vmatpush1.msra.mxu0 0.0
        %1317 = vmatprep.subr.mxu0 0.0
        %1318 = vmatpush1.msra.mxu0 0.0
        %1319 = vmatprep.subr.mxu0 0.0
        %1320 = vmatpush1.msra.mxu0 0.0
        %1321 = vmatprep.subr.mxu0 0.0
        %1322 = vmatpush1.msra.mxu0 0.0
        %1323 = vmatprep.subr.mxu0 0.0
        %1324 = vmatpush1.msra.mxu0 0.0
        %1325 = vmatprep.subr.mxu0 0.0
        %1326 = vmatpush1.msra.mxu0 0.0
        %1327 = vmatprep.subr.mxu0 0.0
        %1328 = vmatpush1.msra.mxu0 0.0
        %1329 = vmatprep.subr.mxu0 0.0
        %1330 = vmatpush1.msra.mxu0 0.0
        %1331 = vmatprep.subr.mxu0 0.0
        %1332 = vmatpush1.msra.mxu0 0.0
        %1333 = vmatprep.subr.mxu0 0.0
        %1334 = vmatpush1.msra.mxu0 0.0
        %1335 = vmatprep.subr.mxu0 0.0
        %1336 = vmatpush1.msra.mxu0 0.0
        %1337 = vmatprep.subr.mxu0 0.0
        %1338 = vmatpush1.msra.mxu0 0.0
        %1339 = vmatprep.subr.mxu0 0.0
        %1340 = vmatpush1.msra.mxu0 0.0
        %1341 = vmatprep.subr.mxu0 0.0
        %1342 = vmatpush1.msra.mxu0 0.0
        %1343 = vmatprep.subr.mxu0 0.0
        %1344 = vmatpush1.msra.mxu0 0.0
        %1345 = vmatprep.subr.mxu0 0.0
        %1346 = vmatpush1.msra.mxu0 0.0
        %1347 = vmatprep.subr.mxu0 0.0
        %1348 = vmatpush1.msra.mxu0 0.0
        %1349 = vmatprep.subr.mxu0 0.0
        %1350 = vmatpush1.msra.mxu0 0.0
        %1351 = vmatprep.subr.mxu0 0.0
        %1352 = vmatpush1.msra.mxu0 0.0
        %1353 = vmatprep.subr.mxu0 0.0
        %1354 = vmatpush1.msra.mxu0 0.0
        %1355 = vmatprep.mubr.f32.mxu0 0.0
        %1356 = vmatmul.mubr.f32.gmra.mrb[0].mxu0 %v218
        %v1357 = vpop.f32.mrb[0].mxu0
        %v1358 = vadd.f32 1e-05, %v1357
        %v1359 = vpop.f32.mrb[0].mxu0
        %1360 = vdwg.mxu0
        %v1361 = vrsqrt.pop %v1358
        %v1362 = vlaneseq
        %v1363 = vshrl.u32 %v1362, 7
        %v1364 = vsub.s32 0, %v1363
        %v1365 = vrot.slane %v1361, %v1364
        %v1366 = vmul.f32 %v1289, %v1365
        %v1367 = vlaneseq
        %v1368 = vshrl.u32 %v1367, 7
        %v1369 = vsub.s32 0, %v1368
        %v1370 = vrot.slane %v1144, %v1369
        %v1371 = vmul.f32 %v1366, %v1370
        %v1372 = vlaneseq
        %v1373 = vshrl.u32 %v1372, 7
        %v1374 = vsub.s32 1, %v1373
        %v1375 = vrot.slane %v1144, %v1374
        %v1376 = vadd.f32 %v1371, %v1375
        %1377 = vst [vmem:[%s214] sm:$0xff] %v1376
        %s1378 = sand.u32 %s97, 1
        %s1379 = scalar_lea.sflag [#allocation4], %s1378
        %s1380 = sand.u32 %s97, 1
        %s1381 = smul.addr %s1380, 8
        %s1382 = scalar_lea.vmem [#allocation8], %s1381
        // Predicated region
        $region45: #{tpu_custom_call.1} parent=31 // pred_check
          %p1383 = pneg %p107
        $region46: #{tpu_custom_call.1} parent=31 // pred_check_branch
          %1385 = sbr.rel (%p1383) target = $region48
        $region47: #{tpu_custom_call.1} parent=31 // pred_region
          %s1387 = ssub.s32 128, 128
          %1388 = vsyncadd %s1379, %s1387
          %s1389 = smul.addr %s21, 128
          %s1390 = scalar_lea.hbm %s3, %s1389
          %s1392 = sshll.u32 %s1382, 4
          %s1393 = int_to_ptr.vmem [resolvable:$true] %s1392
          %1395 = dma.vmem_to_hbm [thread:$0]  %s1393, 128, %s1390, %s1379
        $region48: #{tpu_custom_call.1} parent=31 // pred_fallthru
          _
      $region32: #{tpu_custom_call.1} parent=5 // pred_fallthru
        _
      %p1396 = scmp.le.s32.totalorder 2, %s16
      // Predicated region
      $region49: #{tpu_custom_call.1} parent=5 // pred_check
        %p1397 = pneg %p1396
      $region50: #{tpu_custom_call.1} parent=5 // pred_check_branch
        %1399 = sbr.rel (%p1397) target = $region52
      $region51: #{tpu_custom_call.1} parent=5 // pred_region
        %s1400 = ssub.s32 %s16, 2
        // Predicated region
        $region53: #{tpu_custom_call.1} parent=51 // pred_check
          %p1401 = pneg %p113
        $region54: #{tpu_custom_call.1} parent=51 // pred_check_branch
          %1403 = sbr.rel (%p1401) target = $region56
        $region55: #{tpu_custom_call.1} parent=51 // pred_region
          %s1404 = sand.u32 %s98, 1
          %s1405 = scalar_lea.sflag [#allocation4], %s1404
          %s1406 = sand.u32 %s98, 1
          %s1407 = smul.addr %s1406, 8
          %s1408 = scalar_lea.vmem [#allocation8], %s1407
          %1409 = dma.done %s1405, 128
        $region56: #{tpu_custom_call.1} parent=51 // pred_fallthru
          _
      $region52: #{tpu_custom_call.1} parent=5 // pred_fallthru
        _
    $region6: #{tpu_custom_call.1} parent=1 // loop_footer
      %s20 = sadd.s32 1, %s16
    $region7: #{tpu_custom_call.1} parent=1 // loop_footer_branch
      %15 = sbr.rel target = $region3
    $region8: #{tpu_custom_call.1} parent=1 // loop_exit
      _
    %1410 = vsyncpa [#allocation3], 1
    %s1411 = scalar_lea.sflag [#allocation3], 1
    %1412 = vsyncpa %s1411, 1
    %1413 = vsyncpa [#allocation6], 1
    %1414 = vsyncpa [#allocation4], 1
    %s1415 = scalar_lea.sflag [#allocation4], 1
    %1416 = vsyncpa %s1415, 1

</llo_original>
